<compile_context>
chip_gen: v7x
topology: tpu7x:2x2x1
jax: 0.10.0
libtpu: 0.0.40
codegen_flags: <defaults>
</compile_context>

<pallas_src>
import math
import functools
import numpy as np
import jax
import jax.numpy as jnp
from jax.experimental import pallas as pl
from jax.experimental.pallas import tpu as pltpu


def _pair(v):
    return tuple(v) if isinstance(v, (tuple, list)) else (v, v)


def _round_up(x, m):
    return ((x + m - 1) // m) * m


# ------------------------------- Pallas kernel -------------------------------
def _eaconv_kernel(x_ref, w_ref, b_ref, o_ref, *,
                   KH, KW, SH, SW, DH, DW, TOH, OW, n_t, fold_taps):
    """One (batch, O-tile, OH-tile) grid step of the implicit-GEMM conv.

    x_ref : (SH, SW, Hs, Ws, Cp) bf16  phase-decomposed zero-padded image
    w_ref : (KH*KW*Cp, TO) bf16        if fold_taps (taps folded into GEMM K)
            (KH*KW, Cp, TO) bf16       otherwise
    b_ref : (1, TO)  f32
    o_ref : (M, TO)  f32,  M = TOH*OW  (lane-dense along TO, no transpose)
    """
    Cp = x_ref.shape[-1]
    M = TOH * OW
    TO = b_ref.shape[-1]

    # Output-row tile start in subsampled (phase) coordinates.
    row0 = 0 if n_t == 1 else pl.program_id(2) * TOH

    def window(kh, kw):
        # Tap (kh, kw) -> phase (a, b) + contiguous offsets (q, p).
        a, q = (kh * DH) % SH, (kh * DH) // SH
        b, p = (kw * DW) % SW, (kw * DW) // SW
        return x_ref[a, b, pl.ds(row0 + q, TOH), pl.ds(p, OW), :]  # (TOH,OW,Cp)

    if fold_taps:
        # Small-C path: one MXU matmul with K = KH*KW*Cp.
        patch = jnp.concatenate(
            [window(kh, kw) for kh in range(KH) for kw in range(KW)], axis=-1)
        acc = jnp.dot(patch.reshape(M, KH * KW * Cp), w_ref[...],
                      preferred_element_type=jnp.float32)
    else:
        # Large-C path: tap-decomposed accumulation (K = Cp per matmul);
        # the kh row band is hoisted out of the kw loop when SW == 1.
        acc = jnp.zeros((M, TO), jnp.float32)
        for kh in range(KH):
            a, q = (kh * DH) % SH, (kh * DH) // SH
            if SW == 1:
                band = x_ref[a, 0, pl.ds(row0 + q, TOH), :, :]   # (TOH,Ws,Cp)
                for kw in range(KW):
                    xs = band[:, kw * DW:kw * DW + OW, :].reshape(M, Cp)
                    acc += jnp.dot(xs, w_ref[kh * KW + kw],
                                   preferred_element_type=jnp.float32)
            else:
                for kw in range(KW):
                    xs = window(kh, kw).reshape(M, Cp)
                    acc += jnp.dot(xs, w_ref[kh * KW + kw],
                                   preferred_element_type=jnp.float32)

    # Plain lane-dense store; NCHW conversion happens once, outside the kernel.
    o_ref[...] = (acc + b_ref[...]).astype(o_ref.dtype)


# ------------------------------- tile selection -------------------------------
def _select_tiles(OH, OW, C_pad, O_pad):
    TO = 256 if (O_pad % 256 == 0 and C_pad >= 128) else 128
    # Cap the (M, TO) f32 matmul result so it stays close to the vreg file.
    max_rows = 512 if C_pad >= 128 else 256
    # TODO(synk): also tile OW when a single output row alone exceeds max_rows.
    TOH = max(1, min(OH, max_rows // max(OW, 1)))
    n_t = int(pl.cdiv(OH, TOH))
    return TO, TOH, n_t


# ------------------------------- forward wrapper ------------------------------
@functools.partial(jax.jit,
                   static_argnames=("stride", "padding", "dilation", "out_dtype"))
def eaconv2d_forward(x_nchw, weight_oikk, bias, stride, padding, dilation,
                     out_dtype=jnp.float32):
    N, C, H, W = x_nchw.shape
    O, _, KH, KW = weight_oikk.shape
    SH, SW = stride
    PH, PW = padding
    DH, DW = dilation

    OH = (H + 2 * PH - DH * (KH - 1) - 1) // SH + 1
    OW = (W + 2 * PW - DW * (KW - 1) - 1) // SW + 1

    # ------------------------ padded / tiled sizes --------------------------
    C_pad = _round_up(C, 8)              # sublane/layout friendly channel dim
    O_pad = _round_up(O, 128)            # lane-dense MXU N dim, unmasked stores
    fold_taps = C_pad < 256              # fold taps into K when K=C is starved
    TO, TOH, n_t = _select_tiles(OH, OW, C_pad, O_pad)
    OH_pad = n_t * TOH
    M = TOH * OW
    n_o = O_pad // TO

    # Phase-decomposed image extents (subsampled coordinates).
    q_max = ((KH - 1) * DH) // SH
    p_max = ((KW - 1) * DW) // SW
    Hs, Ws = OH_pad + q_max, OW + p_max
    Ht, Wt = Hs * SH, Ws * SW

    # --------------------- operand prep (bf16 streamed) ---------------------
    # TODO(synk): on v5e, fold the spatial zero-pad into the kernel (boundary-
    # tap masking) to avoid this padded-copy prologue; here it is one fused
    # XLA cast+pad+reshape pass.
    x = x_nchw.astype(jnp.bfloat16).transpose(0, 2, 3, 1)          # NHWC
    x = jnp.pad(x, ((0, 0),
                    (PH, max(0, Ht - (H + PH))),
                    (PW, max(0, Wt - (W + PW))),
                    (0, C_pad - C)))
    x = x[:, :Ht, :Wt, :]
    # (N, Hs, SH, Ws, SW, Cp) -> (N, SH, SW, Hs, Ws, Cp): every conv tap is a
    # contiguous slice inside the kernel for any stride / dilation.
    x = x.reshape(N, Hs, SH, Ws, SW, C_pad).transpose(0, 2, 4, 1, 3, 5)

    w = weight_oikk.astype(jnp.bfloat16)
    w = jnp.pad(w, ((0, O_pad - O), (0, C_pad - C), (0, 0), (0, 0)))
    w = w.transpose(2, 3, 1, 0)                                    # (KH,KW,Cp,Op)
    w = (w.reshape(KH * KW * C_pad, O_pad) if fold_taps
         else w.reshape(KH * KW, C_pad, O_pad))

    b = bias if bias is not None else jnp.zeros((O,), jnp.float32)
    b = jnp.pad(b.astype(jnp.float32), (0, O_pad - O)).reshape(1, O_pad)

    # --------------------- generation-aware VMEM budget ---------------------
    try:
        vmem_cap = int(pltpu.get_tpu_info().vmem_capacity_bytes)
    except Exception:
        vmem_cap = 64 << 20                    # assume the tightest (v7x)
    vmem_budget = int(vmem_cap * 0.85)

    img_bytes = SH * SW * Hs * Ws * C_pad * 2
    w_bytes = KH * KW * C_pad * TO * 2
    out_bytes = M * TO * 4
    patch_bytes = M * (KH * KW * C_pad if fold_taps else C_pad) * 2
    acc_bytes = M * TO * 4

    # Single-buffer the (largest) per-n image block when it would eat a big
    # slice of VMEM: it is only re-fetched at batch boundaries anyway.
    single_buffer_image = 2 * img_bytes > vmem_budget // 4
    img_bufs = 1 if single_buffer_image else 2
    # TODO(synk): when img_bytes alone exceeds the budget, switch to a
    # halo-tiled image (row band of TOH*SH + (KH-1)*DH rows per OH tile)
    # instead of keeping the whole padded image resident.

    est = (img_bufs * img_bytes + 2 * w_bytes + 2 * TO * 4
           + 2 * out_bytes + patch_bytes + acc_bytes)
    vmem_limit = int(min(max(2 * est + (4 << 20), 32 << 20), vmem_budget))

    # ------------------------------ pallas call ------------------------------
    img_kwargs = {}
    if single_buffer_image:
        img_kwargs["pipeline_mode"] = pl.Buffered(1)
    img_spec = pl.BlockSpec((None, SH, SW, Hs, Ws, C_pad),
                            lambda n, o, t: (n, 0, 0, 0, 0, 0), **img_kwargs)
    if fold_taps:
        w_spec = pl.BlockSpec((KH * KW * C_pad, TO), lambda n, o, t: (0, o))
    else:
        w_spec = pl.BlockSpec((KH * KW, C_pad, TO), lambda n, o, t: (0, 0, o))
    b_spec = pl.BlockSpec((1, TO), lambda n, o, t: (0, o))
    out_spec = pl.BlockSpec((None, None, M, TO), lambda n, o, t: (n, t, 0, o))

    kernel = functools.partial(
        _eaconv_kernel, KH=KH, KW=KW, SH=SH, SW=SW, DH=DH, DW=DW,
        TOH=TOH, OW=OW, n_t=n_t, fold_taps=fold_taps)

    out = pl.pallas_call(
        kernel,
        out_shape=jax.ShapeDtypeStruct((N, n_t, M, O_pad), out_dtype),
        grid_spec=pltpu.PrefetchScalarGridSpec(
            num_scalar_prefetch=0,
            grid=(N, n_o, n_t),
            in_specs=[img_spec, w_spec, b_spec],
            out_specs=out_spec),
        compiler_params=pltpu.CompilerParams(
            dimension_semantics=("parallel", "parallel", "parallel"),
            vmem_limit_bytes=vmem_limit),
    )(x, w, b)

    # (N, n_t, TOH*OW, O_pad) -> NCHW via one fused XLA slice + transpose.
    out = out.reshape(N, OH_pad, OW, O_pad)[:, :OH, :, :O]
    return out.transpose(0, 3, 1, 2)


# -------------------------------- module wrapper ------------------------------
def _check_input_dimensions(inputs):
    for i in range(1, len(inputs)):
        a, b = inputs[i - 1], inputs[i]
        if a.shape[0] != b.shape[0] or a.shape[2] != b.shape[2] \
                or a.shape[3] != b.shape[3]:
            return False
    return True


class EAConv2d:
    """JAX/Pallas re-implementation of the PyTorch EAConv2d forward pass."""

    def __init__(self, in_channels_list, out_channels, kernel_size, stride=1,
                 padding=0, dilation=1, groups=1, bias=True, *, key):
        if groups != 1:
            raise NotImplementedError
        if isinstance(in_channels_list, int):
            in_channels_list = (in_channels_list,)
        self.in_channels_list = tuple(in_channels_list)
        self.in_channels = sum(self.in_channels_list)
        self.out_channels = out_channels
        self.kernel_size = _pair(kernel_size)
        self.stride = _pair(stride)
        self.padding = _pair(padding)
        self.dilation = _pair(dilation)
        self.groups = groups

        # reset_parameters(): uniform(-stdv, stdv), stdv = 1/sqrt(C_total*KH*KW)
        n = self.in_channels
        for k in self.kernel_size:
            n *= k
        stdv = 1.0 / math.sqrt(n)

        keys = jax.random.split(key, len(self.in_channels_list) + 1)
        self.weight = [
            jax.random.uniform(keys[i],
                               (out_channels, c // groups, *self.kernel_size),
                               dtype=jnp.float32, minval=-stdv, maxval=stdv)
            for i, c in enumerate(self.in_channels_list)
        ]
        self.bias = (jax.random.uniform(keys[-1], (out_channels,),
                                        dtype=jnp.float32, minval=-stdv,
                                        maxval=stdv) if bias else None)

    def __call__(self, *inputs):
        if len(inputs) != len(self.in_channels_list):
            raise ValueError("number of inputs must match in_channels_list")
        if not _check_input_dimensions(inputs):
            raise ValueError("all except the channel dimensions of input "
                             "tensors must coincide")
        # sum_i conv(x_i, W_i) == conv(concat_i x_i, concat_i W_i)  (groups=1)
        x = jnp.concatenate(inputs, axis=1)               # (N, C_total, H, W)
        w = jnp.concatenate(self.weight, axis=1)          # (O, C_total, KH, KW)
        return eaconv2d_forward(x, w, self.bias, self.stride, self.padding,
                                self.dilation)


# ------------------------------- reference check ------------------------------
def _reference_conv(x, w, b, stride, padding, dilation):
    # Same bf16-rounded operands as the kernel (bf16 streams, f32 accumulate).
    xr = x.astype(jnp.bfloat16).astype(jnp.float32)
    wr = w.astype(jnp.bfloat16).astype(jnp.float32)
    out = jax.lax.conv_general_dilated(
        xr, wr, window_strides=stride,
        padding=[(padding[0], padding[0]), (padding[1], padding[1])],
        rhs_dilation=dilation,
        dimension_numbers=("NCHW", "OIHW", "NCHW"))
    if b is not None:
        out = out + b[None, :, None, None]
    return out


# -------------------------------------- main ----------------------------------
if __name__ == "__main__":
    key = jax.random.PRNGKey(0)
    k_mod, k_x0, k_x1, k_x2, k_w2, k_x3, k_w3, k_b3 = jax.random.split(key, 8)

    # 1) Module-level test: two inputs, stride 1 (small-C tap-folded path).
    module = EAConv2d((4, 3), 8, kernel_size=3, stride=1, padding=1,
                      dilation=1, bias=True, key=k_mod)
    x0 = jax.random.normal(k_x0, (2, 4, 16, 16), jnp.float32)
    x1 = jax.random.normal(k_x1, (2, 3, 16, 16), jnp.float32)
    out1 = jax.block_until_ready(module(x0, x1))
    assert out1.shape == (2, 8, 16, 16), out1.shape
    ref1 = _reference_conv(jnp.concatenate([x0, x1], axis=1),
                           jnp.concatenate(module.weight, axis=1),
                           module.bias, module.stride, module.padding,
                           module.dilation)
    np.testing.assert_allclose(np.asarray(out1), np.asarray(ref1),
                               rtol=2e-3, atol=2e-3)

    # 2) Stride-2 path (phase-decomposed windows) with multiple OH tiles.
    x2 = jax.random.normal(k_x2, (2, 5, 48, 48), jnp.float32)
    w2 = jax.random.normal(k_w2, (10, 5, 3, 3), jnp.float32) * 0.1
    out2 = jax.block_until_ready(
        eaconv2d_forward(x2, w2, None, (2, 2), (1, 1), (1, 1)))
    ref2 = _reference_conv(x2, w2, None, (2, 2), (1, 1), (1, 1))
    assert out2.shape == ref2.shape, (out2.shape, ref2.shape)
    np.testing.assert_allclose(np.asarray(out2), np.asarray(ref2),
                               rtol=2e-3, atol=2e-3)

    # 3) Large-C tap-decomposed path with dilation 2 and bias.
    x3 = jax.random.normal(k_x3, (1, 256, 8, 8), jnp.float32)
    w3 = jax.random.normal(k_w3, (16, 256, 3, 3), jnp.float32) * 0.02
    b3 = jax.random.normal(k_b3, (16,), jnp.float32) * 0.1
    out3 = jax.block_until_ready(
        eaconv2d_forward(x3, w3, b3, (1, 1), (2, 2), (2, 2)))
    ref3 = _reference_conv(x3, w3, b3, (1, 1), (2, 2), (2, 2))
    assert out3.shape == ref3.shape, (out3.shape, ref3.shape)
    np.testing.assert_allclose(np.asarray(out3), np.asarray(ref3),
                               rtol=2e-3, atol=2e-3)

    print("KERNEL_OK")
</pallas_src>

<mosaic_0001>
module attributes {stable_mosaic.version = 11 : i64} {
  func.func @_eaconv_kernel(%arg0: i32, %arg1: i32, %arg2: i32, %arg3: memref<1x1x1x18x18x8xbf16, #tpu.memory_space<vmem>>, %arg4: memref<72x128xbf16, #tpu.memory_space<vmem>>, %arg5: memref<1x128xf32, #tpu.memory_space<vmem>>, %arg6: memref<1x1x256x128xf32, #tpu.memory_space<vmem>>) attributes {dimension_semantics = [#tpu.dimension_semantics<parallel>, #tpu.dimension_semantics<parallel>, #tpu.dimension_semantics<parallel>], iteration_bounds = array<i64: 2, 1, 1>, scalar_prefetch = 0 : i64, scratch_operands = 0 : i64, tpu.core_type = #tpu.core_type<tc>, window_params = [{transform_indices = @transform_0, window_bounds = array<i64: 1, 1, 1, 18, 18, 8>}, {transform_indices = @transform_1, window_bounds = array<i64: 72, 128>}, {transform_indices = @transform_2, window_bounds = array<i64: 1, 128>}, {transform_indices = @transform_3, window_bounds = array<i64: 1, 1, 256, 128>}]} {
    %c0 = arith.constant 0 : index
    %c0_0 = arith.constant 0 : index
    %c0_1 = arith.constant 0 : index
    %c0_2 = arith.constant 0 : index
    %c0_3 = arith.constant 0 : index
    %c0_4 = arith.constant 0 : index
    %0 = vector.load %arg3[%c0, %c0_0, %c0_1, %c0_2, %c0_3, %c0_4] : memref<1x1x1x18x18x8xbf16, #tpu.memory_space<vmem>>, vector<1x1x1x16x16x8xbf16>
    %1 = vector.shape_cast %0 : vector<1x1x1x16x16x8xbf16> to vector<16x16x8xbf16>
    %c0_5 = arith.constant 0 : index
    %c0_6 = arith.constant 0 : index
    %c0_7 = arith.constant 0 : index
    %c0_8 = arith.constant 0 : index
    %c1 = arith.constant 1 : index
    %c0_9 = arith.constant 0 : index
    %2 = vector.load %arg3[%c0_5, %c0_6, %c0_7, %c0_8, %c1, %c0_9] : memref<1x1x1x18x18x8xbf16, #tpu.memory_space<vmem>>, vector<1x1x1x16x16x8xbf16>
    %3 = vector.shape_cast %2 : vector<1x1x1x16x16x8xbf16> to vector<16x16x8xbf16>
    %c0_10 = arith.constant 0 : index
    %c0_11 = arith.constant 0 : index
    %c0_12 = arith.constant 0 : index
    %c0_13 = arith.constant 0 : index
    %c2 = arith.constant 2 : index
    %c0_14 = arith.constant 0 : index
    %4 = vector.load %arg3[%c0_10, %c0_11, %c0_12, %c0_13, %c2, %c0_14] : memref<1x1x1x18x18x8xbf16, #tpu.memory_space<vmem>>, vector<1x1x1x16x16x8xbf16>
    %5 = vector.shape_cast %4 : vector<1x1x1x16x16x8xbf16> to vector<16x16x8xbf16>
    %c0_15 = arith.constant 0 : index
    %c0_16 = arith.constant 0 : index
    %c0_17 = arith.constant 0 : index
    %c1_18 = arith.constant 1 : index
    %c0_19 = arith.constant 0 : index
    %c0_20 = arith.constant 0 : index
    %6 = vector.load %arg3[%c0_15, %c0_16, %c0_17, %c1_18, %c0_19, %c0_20] : memref<1x1x1x18x18x8xbf16, #tpu.memory_space<vmem>>, vector<1x1x1x16x16x8xbf16>
    %7 = vector.shape_cast %6 : vector<1x1x1x16x16x8xbf16> to vector<16x16x8xbf16>
    %c0_21 = arith.constant 0 : index
    %c0_22 = arith.constant 0 : index
    %c0_23 = arith.constant 0 : index
    %c1_24 = arith.constant 1 : index
    %c1_25 = arith.constant 1 : index
    %c0_26 = arith.constant 0 : index
    %8 = vector.load %arg3[%c0_21, %c0_22, %c0_23, %c1_24, %c1_25, %c0_26] : memref<1x1x1x18x18x8xbf16, #tpu.memory_space<vmem>>, vector<1x1x1x16x16x8xbf16>
    %9 = vector.shape_cast %8 : vector<1x1x1x16x16x8xbf16> to vector<16x16x8xbf16>
    %c0_27 = arith.constant 0 : index
    %c0_28 = arith.constant 0 : index
    %c0_29 = arith.constant 0 : index
    %c1_30 = arith.constant 1 : index
    %c2_31 = arith.constant 2 : index
    %c0_32 = arith.constant 0 : index
    %10 = vector.load %arg3[%c0_27, %c0_28, %c0_29, %c1_30, %c2_31, %c0_32] : memref<1x1x1x18x18x8xbf16, #tpu.memory_space<vmem>>, vector<1x1x1x16x16x8xbf16>
    %11 = vector.shape_cast %10 : vector<1x1x1x16x16x8xbf16> to vector<16x16x8xbf16>
    %c0_33 = arith.constant 0 : index
    %c0_34 = arith.constant 0 : index
    %c0_35 = arith.constant 0 : index
    %c2_36 = arith.constant 2 : index
    %c0_37 = arith.constant 0 : index
    %c0_38 = arith.constant 0 : index
    %12 = vector.load %arg3[%c0_33, %c0_34, %c0_35, %c2_36, %c0_37, %c0_38] : memref<1x1x1x18x18x8xbf16, #tpu.memory_space<vmem>>, vector<1x1x1x16x16x8xbf16>
    %13 = vector.shape_cast %12 : vector<1x1x1x16x16x8xbf16> to vector<16x16x8xbf16>
    %c0_39 = arith.constant 0 : index
    %c0_40 = arith.constant 0 : index
    %c0_41 = arith.constant 0 : index
    %c2_42 = arith.constant 2 : index
    %c1_43 = arith.constant 1 : index
    %c0_44 = arith.constant 0 : index
    %14 = vector.load %arg3[%c0_39, %c0_40, %c0_41, %c2_42, %c1_43, %c0_44] : memref<1x1x1x18x18x8xbf16, #tpu.memory_space<vmem>>, vector<1x1x1x16x16x8xbf16>
    %15 = vector.shape_cast %14 : vector<1x1x1x16x16x8xbf16> to vector<16x16x8xbf16>
    %c0_45 = arith.constant 0 : index
    %c0_46 = arith.constant 0 : index
    %c0_47 = arith.constant 0 : index
    %c2_48 = arith.constant 2 : index
    %c2_49 = arith.constant 2 : index
    %c0_50 = arith.constant 0 : index
    %16 = vector.load %arg3[%c0_45, %c0_46, %c0_47, %c2_48, %c2_49, %c0_50] : memref<1x1x1x18x18x8xbf16, #tpu.memory_space<vmem>>, vector<1x1x1x16x16x8xbf16>
    %17 = vector.shape_cast %16 : vector<1x1x1x16x16x8xbf16> to vector<16x16x8xbf16>
    %18 = tpu.concatenate %1, %3, %5, %7, %9, %11, %13, %15, %17 in 2 : vector<16x16x8xbf16>, vector<16x16x8xbf16>, vector<16x16x8xbf16>, vector<16x16x8xbf16>, vector<16x16x8xbf16>, vector<16x16x8xbf16>, vector<16x16x8xbf16>, vector<16x16x8xbf16>, vector<16x16x8xbf16> -> vector<16x16x72xbf16>
    %19 = vector.shape_cast %18 : vector<16x16x72xbf16> to vector<256x72xbf16>
    %c0_51 = arith.constant 0 : index
    %c0_52 = arith.constant 0 : index
    %20 = vector.load %arg4[%c0_51, %c0_52] : memref<72x128xbf16, #tpu.memory_space<vmem>>, vector<72x128xbf16>
    %cst = arith.constant dense<0.000000e+00> : vector<256x128xf32>
    %21 = tpu.matmul %19, %20, %cst {dimension_numbers = #tpu.dot_dimension_numbers<[1], [0], [0], [1], [0, 0, 1, 1], [], []>} : vector<256x72xbf16>, vector<72x128xbf16>, vector<256x128xf32> -> vector<256x128xf32>
    %c0_53 = arith.constant 0 : index
    %c0_54 = arith.constant 0 : index
    %22 = vector.load %arg5[%c0_53, %c0_54] : memref<1x128xf32, #tpu.memory_space<vmem>>, vector<1x128xf32>
    %23 = vector.broadcast %22 : vector<1x128xf32> to vector<256x128xf32>
    %24 = arith.addf %21, %23 : vector<256x128xf32>
    %c0_55 = arith.constant 0 : index
    %c0_56 = arith.constant 0 : index
    %c0_57 = arith.constant 0 : index
    %c0_58 = arith.constant 0 : index
    %25 = vector.load %arg6[%c0_55, %c0_56, %c0_57, %c0_58] : memref<1x1x256x128xf32, #tpu.memory_space<vmem>>, vector<1x1x256x128xf32>
    %26 = vector.shape_cast %25 : vector<1x1x256x128xf32> to vector<256x128xf32>
    %27 = vector.shape_cast %24 : vector<256x128xf32> to vector<1x1x256x128xf32>
    tpu.vector_store %arg6[%c0_55, %c0_56, %c0_57, %c0_58], %27 {strides = array<i32>} : memref<1x1x256x128xf32, #tpu.memory_space<vmem>>, vector<1x1x256x128xf32>,
    return
  }
  func.func @transform_0(%arg0: i32, %arg1: i32, %arg2: i32) -> (i32, i32, i32, i32, i32, i32) {
    %c0_i32 = arith.constant 0 : i32
    %c0_i32_0 = arith.constant 0 : i32
    %c0_i32_1 = arith.constant 0 : i32
    %c0_i32_2 = arith.constant 0 : i32
    %c0_i32_3 = arith.constant 0 : i32
    %c0_i32_4 = arith.constant 0 : i32
    return %arg0, %c0_i32, %c0_i32_0, %c0_i32_1, %c0_i32_2, %c0_i32_3 : i32, i32, i32, i32, i32, i32
  }
  func.func @transform_1(%arg0: i32, %arg1: i32, %arg2: i32) -> (i32, i32) {
    %c0_i32 = arith.constant 0 : i32
    %c0_i32_0 = arith.constant 0 : i32
    return %c0_i32, %arg1 : i32, i32
  }
  func.func @transform_2(%arg0: i32, %arg1: i32, %arg2: i32) -> (i32, i32) {
    %c0_i32 = arith.constant 0 : i32
    %c0_i32_0 = arith.constant 0 : i32
    return %c0_i32, %arg1 : i32, i32
  }
  func.func @transform_3(%arg0: i32, %arg1: i32, %arg2: i32) -> (i32, i32, i32, i32) {
    %c0_i32 = arith.constant 0 : i32
    %c0_i32_0 = arith.constant 0 : i32
    return %arg0, %arg2, %c0_i32, %arg1 : i32, i32, i32, i32
  }
}

</mosaic_0001>

<llo_original>
// kernel: eaconv2d_forward.1
$region0: #{eaconv2d_forward.1}
  #allocation0 [shape = 'u32[]', space=smem, size = 0x4, offset = 0x4, fixed_abs, tag = 'smem constant byte address 0x4 - core index']
  #allocation1 [shape = 'u32[144,128]{1,0:T(1,128)}', space=vmem, size = 0x12000, scoped, tag = 'internal scratch']
  %s0 = inlined_call_operand.vmem [shape: bf16[2,1,1,18,18,8], index: 0, kind: input, shape index: {}]
  %s1 = inlined_call_operand.vmem [shape: bf16[72,128], index: 1, kind: input, shape index: {}]
  %s2 = inlined_call_operand.vmem [shape: f32[1,128], index: 2, kind: input, shape index: {}]
  %s3 = inlined_call_operand.vmem [shape: f32[2,1,256,128], index: 3, kind: output, shape index: {}]
  %s4 = sld [smem:[#allocation0]]
  $region45: #{eaconv2d_forward.1} parent=0
    _
  %s6 = ssub.s32 1, %s4
  %s7 = scalar_select 0, %s6, %s4
  loop: start=0, step=1, limit=4
  $region2: #{eaconv2d_forward.1} parent=0 // loop_pre_header
    _
  $region3: #{eaconv2d_forward.1} parent=0 // loop_header
    %s9 = sphi 0, %s13
    %p10 = scmp.ge.s32.totalorder %s9, 4
    %s16 = sphi 0, %s35
    %s17 = sphi 0, %s31
    %s18 = sphi 0, %s27
    %s19 = sphi 0, %s16
    %s20 = sphi 0, %s17
    %s21 = sphi 0, %s18
    %s22 = sphi 0, %s19
    %s23 = sphi 0, %s20
    %s24 = sphi 0, %s21
    %s38 = sphi 0, %s40
    %s41 = sphi 0, %s38
    %s42 = sphi 0, %s41
    %s58 = sphi 0, %s42
    %s64 = sphi 0, %s66
    %s67 = sphi 0, %s64
    %s68 = sphi 0, %s67
    %s84 = sphi 0, %s68
    %s90 = sphi 0, %s92
    %s93 = sphi 0, %s90
    %s94 = sphi 0, %s93
    %s110 = sphi 0, %s94
    %s120 = sphi 0, %s122
    %s123 = sphi 0, %s120
    %s124 = sphi 0, %s123
    %s140 = sphi 0, %s124
  $region4: #{eaconv2d_forward.1} parent=0 // loop_header_branch
    %12 = sbr.rel (%p10) target = $region8
  $region5: #{eaconv2d_forward.1} parent=0 // loop_body
    %s14 = ssub.s32 %s9, 1
    %s15 = ssub.s32 %s9, 2
    %s25 = sadd.s32 1, %s18
    %p26 = scmp.ge.s32.totalorder %s25, 1
    %s27 = scalar_select %p26, 0, %s25
    %s28 = sadd.s32 1, %s17
    %s29 = scalar_select %p26, %s28, %s17
    %p30 = scmp.ge.s32.totalorder %s29, 1
    %s31 = scalar_select %p30, 0, %s29
    %s32 = sadd.s32 1, %s16
    %s33 = scalar_select %p30, %s32, %s16
    %p34 = scmp.ge.s32.totalorder %s33, 2
    %s35 = scalar_select %p34, 0, %s33
    %s36 = ssub.s32 %s16, %s35
    %p37 = scmp.eq.s32.totalorder %s36, 0
    %s39 = sadd.s32 %s38, 1
    %s40 = scalar_select %p37, %s38, %s39
    %p43 = pneg %p37
    %p44 = scmp.eq.s32.totalorder %s9, 1
    %p45 = por %p43, %p44
    %p46 = scmp.ne.s32.totalorder %s38, %s41
    %p47 = scmp.eq.s32.totalorder %s9, 0
    %p48 = por %p46, %p47
    %p49 = scmp.ne.s32.totalorder %s38, %s41
    %p50 = scmp.eq.s32.totalorder %s14, 1
    %p51 = por %p49, %p50
    %p52 = scmp.ne.s32.totalorder %s41, %s42
    %p53 = scmp.eq.s32.totalorder %s14, 0
    %p54 = por %p52, %p53
    %p55 = scmp.ne.s32.totalorder %s41, %s42
    %p56 = scmp.eq.s32.totalorder %s15, 1
    %p57 = por %p55, %p56
    %p59 = scmp.ne.s32.totalorder %s42, %s58
    %p60 = scmp.eq.s32.totalorder %s15, 0
    %p61 = por %p59, %p60
    %s62 = ssub.s32 %s17, %s31
    %p63 = scmp.eq.s32.totalorder %s62, 0
    %s65 = sadd.s32 %s64, 1
    %s66 = scalar_select %p63, %s64, %s65
    %p69 = pneg %p63
    %p70 = scmp.eq.s32.totalorder %s9, 1
    %p71 = por %p69, %p70
    %p72 = scmp.ne.s32.totalorder %s64, %s67
    %p73 = scmp.eq.s32.totalorder %s9, 0
    %p74 = por %p72, %p73
    %p75 = scmp.ne.s32.totalorder %s64, %s67
    %p76 = scmp.eq.s32.totalorder %s14, 1
    %p77 = por %p75, %p76
    %p78 = scmp.ne.s32.totalorder %s67, %s68
    %p79 = scmp.eq.s32.totalorder %s14, 0
    %p80 = por %p78, %p79
    %p81 = scmp.ne.s32.totalorder %s67, %s68
    %p82 = scmp.eq.s32.totalorder %s15, 1
    %p83 = por %p81, %p82
    %p85 = scmp.ne.s32.totalorder %s68, %s84
    %p86 = scmp.eq.s32.totalorder %s15, 0
    %p87 = por %p85, %p86
    %s88 = ssub.s32 %s17, %s31
    %p89 = scmp.eq.s32.totalorder %s88, 0
    %s91 = sadd.s32 %s90, 1
    %s92 = scalar_select %p89, %s90, %s91
    %p95 = pneg %p89
    %p96 = scmp.eq.s32.totalorder %s9, 1
    %p97 = por %p95, %p96
    %p98 = scmp.ne.s32.totalorder %s90, %s93
    %p99 = scmp.eq.s32.totalorder %s9, 0
    %p100 = por %p98, %p99
    %p101 = scmp.ne.s32.totalorder %s90, %s93
    %p102 = scmp.eq.s32.totalorder %s14, 1
    %p103 = por %p101, %p102
    %p104 = scmp.ne.s32.totalorder %s93, %s94
    %p105 = scmp.eq.s32.totalorder %s14, 0
    %p106 = por %p104, %p105
    %p107 = scmp.ne.s32.totalorder %s93, %s94
    %p108 = scmp.eq.s32.totalorder %s15, 1
    %p109 = por %p107, %p108
    %p111 = scmp.ne.s32.totalorder %s94, %s110
    %p112 = scmp.eq.s32.totalorder %s15, 0
    %p113 = por %p111, %p112
    %s114 = ssub.s32 %s16, %s35
    %s115 = ssub.s32 %s18, %s27
    %s116 = sor.u32 %s114, %s115
    %s117 = ssub.s32 %s17, %s31
    %s118 = sor.u32 %s116, %s117
    %p119 = scmp.eq.s32.totalorder %s118, 0
    %s121 = sadd.s32 %s120, 1
    %s122 = scalar_select %p119, %s120, %s121
    %p125 = pneg %p119
    %p126 = scmp.eq.s32.totalorder %s9, 1
    %p127 = por %p125, %p126
    %p128 = scmp.ne.s32.totalorder %s120, %s123
    %p129 = scmp.eq.s32.totalorder %s9, 0
    %p130 = por %p128, %p129
    %p131 = scmp.ne.s32.totalorder %s120, %s123
    %p132 = scmp.eq.s32.totalorder %s14, 1
    %p133 = por %p131, %p132
    %p134 = scmp.ne.s32.totalorder %s123, %s124
    %p135 = scmp.eq.s32.totalorder %s14, 0
    %p136 = por %p134, %p135
    %p137 = scmp.ne.s32.totalorder %s123, %s124
    %p138 = scmp.eq.s32.totalorder %s15, 1
    %p139 = por %p137, %p138
    %p141 = scmp.ne.s32.totalorder %s124, %s140
    %p142 = scmp.eq.s32.totalorder %s15, 0
    %p143 = por %p141, %p142
    %p144 = scmp.le.s32.totalorder 1, %s9
    %p145 = scmp.lt.s32.totalorder %s9, 3
    %p146 = pnand %p144, %p145
    %p147 = pneg %p146
    // Predicated region
    $region9: #{eaconv2d_forward.1} parent=5 // pred_check
      _
    $region10: #{eaconv2d_forward.1} parent=5 // pred_check_branch
      %149 = sbr.rel (%p146) target = $region12
    $region11: #{eaconv2d_forward.1} parent=5 // pred_region
      %s150 = ssub.s32 %s9, 1
      // Predicated region
      $region13: #{eaconv2d_forward.1} parent=11 // pred_check
        %p151 = pneg %p80
      $region14: #{eaconv2d_forward.1} parent=11 // pred_check_branch
        %153 = sbr.rel (%p151) target = $region16
      $region15: #{eaconv2d_forward.1} parent=11 // pred_region
        %p154 = scmp.lt.s32.totalorder %s20, 0
        %s155 = scalar_select %p154, %s20, 0
        %s156 = smul.addr %s155, 4
        %s157 = scalar_lea.vmem %s1, %s156
      $region16: #{eaconv2d_forward.1} parent=11 // pred_fallthru
        _
      // Predicated region
      $region17: #{eaconv2d_forward.1} parent=11 // pred_check
        %p158 = pneg %p106
      $region18: #{eaconv2d_forward.1} parent=11 // pred_check_branch
        %160 = sbr.rel (%p158) target = $region20
      $region19: #{eaconv2d_forward.1} parent=11 // pred_region
        %p161 = scmp.lt.s32.totalorder %s20, 0
        %s162 = scalar_select %p161, %s20, 0
        %s163 = scalar_lea.vmem %s2, %s162
      $region20: #{eaconv2d_forward.1} parent=11 // pred_fallthru
        _
    $region12: #{eaconv2d_forward.1} parent=5 // pred_fallthru
      _
    %p164 = scmp.lt.s32.totalorder %s9, 2
    // Predicated region
    $region21: #{eaconv2d_forward.1} parent=5 // pred_check
      %p165 = pneg %p164
    $region22: #{eaconv2d_forward.1} parent=5 // pred_check_branch
      %167 = sbr.rel (%p165) target = $region24
    $region23: #{eaconv2d_forward.1} parent=5 // pred_region
      // Predicated region
      $region25: #{eaconv2d_forward.1} parent=23 // pred_check
        %p168 = pneg %p48
      $region26: #{eaconv2d_forward.1} parent=23 // pred_check_branch
        %170 = sbr.rel (%p168) target = $region28
      $region27: #{eaconv2d_forward.1} parent=23 // pred_region
        %p171 = scmp.lt.s32.totalorder %s16, 1
        %s172 = scalar_select %p171, %s16, 1
        %s173 = smul.addr %s172, 54
        %s174 = smul.addr %s173, 4
        %s175 = scalar_lea.vmem %s0, %s174
      $region28: #{eaconv2d_forward.1} parent=23 // pred_fallthru
        _
    $region24: #{eaconv2d_forward.1} parent=5 // pred_fallthru
      _
    %p176 = scmp.le.s32.totalorder 1, %s9
    %p177 = scmp.lt.s32.totalorder %s9, 3
    %p178 = pnand %p176, %p177
    %p179 = pneg %p178
    // Predicated region
    $region29: #{eaconv2d_forward.1} parent=5 // pred_check
      _
    $region30: #{eaconv2d_forward.1} parent=5 // pred_check_branch
      %181 = sbr.rel (%p178) target = $region32
    $region31: #{eaconv2d_forward.1} parent=5 // pred_region
      %s182 = ssub.s32 %s9, 1
      %p183 = scmp.lt.s32.totalorder %s19, 1
      %s184 = scalar_select %p183, %s19, 1
      %s185 = smul.addr %s184, 54
      %s186 = smul.addr %s185, 4
      %s187 = scalar_lea.vmem %s0, %s186
      %p188 = pneg %p54
      %p189 = pneg %p51
      %p190 = scmp.lt.s32.totalorder %s20, 0
      %s191 = scalar_select %p190, %s20, 0
      %s192 = smul.addr %s191, 4
      %s193 = scalar_lea.vmem %s1, %s192
      %p194 = pneg %p80
      %p195 = pneg %p77
      %p196 = scmp.lt.s32.totalorder %s20, 0
      %s197 = scalar_select %p196, %s20, 0
      %s198 = scalar_lea.vmem %s2, %s197
      %p199 = pneg %p106
      %p200 = pneg %p103
      %p201 = pneg %p136
      %p202 = pneg %p133
      %p203 = scmp.lt.s32.totalorder %s19, 1
      %s204 = scalar_select %p203, %s19, 1
      %p205 = scmp.lt.s32.totalorder %s21, 0
      %s206 = scalar_select %p205, %s21, 0
      %p207 = scmp.lt.s32.totalorder %s20, 0
      %s208 = scalar_select %p207, %s20, 0
      %s209 = smul.addr %s206, 32
      %s210 = sadd.s32 %s208, %s209
      %s211 = smul.addr %s204, 32
      %s212 = sadd.s32 %s210, %s211
      %s213 = smul.addr %s212, 8
      %s214 = scalar_lea.vmem %s3, %s213
      %p215 = scmp.lt.s32.totalorder %s19, 1
      %s216 = scalar_select %p215, %s19, 1
      %s217 = smul.addr %s216, 54
      %s218 = smul.addr %s217, 4
      %s219 = scalar_lea.vmem %s0, %s218
      %p220 = scmp.lt.s32.totalorder %s20, 0
      %s221 = scalar_select %p220, %s20, 0
      %s222 = smul.addr %s221, 4
      %s223 = scalar_lea.vmem %s1, %s222
      %p224 = scmp.lt.s32.totalorder %s20, 0
      %s225 = scalar_select %p224, %s20, 0
      %s226 = scalar_lea.vmem %s2, %s225
      %p227 = scmp.lt.s32.totalorder %s19, 1
      %s228 = scalar_select %p227, %s19, 1
      %p229 = scmp.lt.s32.totalorder %s21, 0
      %s230 = scalar_select %p229, %s21, 0
      %p231 = scmp.lt.s32.totalorder %s20, 0
      %s232 = scalar_select %p231, %s20, 0
      %s233 = smul.addr %s230, 32
      %s234 = sadd.s32 %s232, %s233
      %s235 = smul.addr %s228, 32
      %s236 = sadd.s32 %s234, %s235
      %s237 = smul.addr %s236, 8
      %s238 = scalar_lea.vmem %s3, %s237
      %v240 = vld [vmem:[%s219] sm:$0xf]
      %v241 = vld [vmem:[%s219 + $0x4] sm:$0xf]
      %v242 = vld [vmem:[%s219 + $0xc] sm:$0xf]
      %v243 = vld [vmem:[%s219 + $0x10] sm:$0xf]
      %v244 = vld [vmem:[%s219 + $0x18] sm:$0xf]
      %v245 = vld [vmem:[%s219 + $0x1c] sm:$0xf]
      %v246 = vld [vmem:[%s219 + $0x24] sm:$0xf]
      %v247 = vld [vmem:[%s219 + $0x28] sm:$0xf]
      %v248 = vld [vmem:[%s219 + $0x30] sm:$0xf]
      %v249 = vld [vmem:[%s219 + $0x34] sm:$0xf]
      %v250 = vld [vmem:[%s219 + $0x3c] sm:$0xf]
      %v251 = vld [vmem:[%s219 + $0x40] sm:$0xf]
      %v252 = vld [vmem:[%s219 + $0x48] sm:$0xf]
      %v253 = vld [vmem:[%s219 + $0x4c] sm:$0xf]
      %v254 = vld [vmem:[%s219 + $0x54] sm:$0xf]
      %v255 = vld [vmem:[%s219 + $0x58] sm:$0xf]
      %v256 = vld [vmem:[%s219 + $0x60] sm:$0xf]
      %v257 = vld [vmem:[%s219 + $0x64] sm:$0xf]
      %v258 = vld [vmem:[%s219 + $0x6c] sm:$0xf]
      %v259 = vld [vmem:[%s219 + $0x70] sm:$0xf]
      %v260 = vld [vmem:[%s219 + $0x78] sm:$0xf]
      %v261 = vld [vmem:[%s219 + $0x7c] sm:$0xf]
      %v262 = vld [vmem:[%s219 + $0x84] sm:$0xf]
      %v263 = vld [vmem:[%s219 + $0x88] sm:$0xf]
      %v264 = vld [vmem:[%s219 + $0x90] sm:$0xf]
      %v265 = vld [vmem:[%s219 + $0x94] sm:$0xf]
      %v266 = vld [vmem:[%s219 + $0x9c] sm:$0xf]
      %v267 = vld [vmem:[%s219 + $0xa0] sm:$0xf]
      %v268 = vld [vmem:[%s219 + $0xa8] sm:$0xf]
      %v269 = vld [vmem:[%s219 + $0xac] sm:$0xf]
      %v270 = vld [vmem:[%s219 + $0xb4] sm:$0xf]
      %v271 = vld [vmem:[%s219 + $0xb8] sm:$0xf]
      %v272 = vld [vmem:[%s219 + $0x8] sm:$0x1]
      %v273 = vld [vmem:[%s219 + $0x14] sm:$0x1]
      %v274 = vld [vmem:[%s219 + $0x20] sm:$0x1]
      %v275 = vld [vmem:[%s219 + $0x2c] sm:$0x1]
      %v276 = vld [vmem:[%s219 + $0x38] sm:$0x1]
      %v277 = vld [vmem:[%s219 + $0x44] sm:$0x1]
      %v278 = vld [vmem:[%s219 + $0x50] sm:$0x1]
      %v279 = vld [vmem:[%s219 + $0x5c] sm:$0x1]
      %v280 = vld [vmem:[%s219 + $0x68] sm:$0x1]
      %v281 = vld [vmem:[%s219 + $0x74] sm:$0x1]
      %v282 = vld [vmem:[%s219 + $0x80] sm:$0x1]
      %v283 = vld [vmem:[%s219 + $0x8c] sm:$0x1]
      %v284 = vld [vmem:[%s219 + $0x98] sm:$0x1]
      %v285 = vld [vmem:[%s219 + $0xa4] sm:$0x1]
      %v286 = vld [vmem:[%s219 + $0xb0] sm:$0x1]
      %v287 = vld [vmem:[%s219 + $0xbc] sm:$0x1]
      %v288 = vld [vmem:[%s219] sm:$0xe]
      %v289 = vld [vmem:[%s219 + $0xc] sm:$0xe]
      %v290 = vld [vmem:[%s219 + $0x18] sm:$0xe]
      %v291 = vld [vmem:[%s219 + $0x24] sm:$0xe]
      %v292 = vld [vmem:[%s219 + $0x30] sm:$0xe]
      %v293 = vld [vmem:[%s219 + $0x3c] sm:$0xe]
      %v294 = vld [vmem:[%s219 + $0x48] sm:$0xe]
      %v295 = vld [vmem:[%s219 + $0x54] sm:$0xe]
      %v296 = vld [vmem:[%s219 + $0x60] sm:$0xe]
      %v297 = vld [vmem:[%s219 + $0x6c] sm:$0xe]
      %v298 = vld [vmem:[%s219 + $0x78] sm:$0xe]
      %v299 = vld [vmem:[%s219 + $0x84] sm:$0xe]
      %v300 = vld [vmem:[%s219 + $0x90] sm:$0xe]
      %v301 = vld [vmem:[%s219 + $0x9c] sm:$0xe]
      %v302 = vld [vmem:[%s219 + $0xa8] sm:$0xe]
      %v303 = vld [vmem:[%s219 + $0xb4] sm:$0xe]
      %s304 = scalar_lea.vmem %s219, 12
      %v305 = vld [vmem:[%s304] sm:$0xf]
      %v306 = vld [vmem:[%s304 + $0x4] sm:$0xf]
      %v307 = vld [vmem:[%s304 + $0xc] sm:$0xf]
      %v308 = vld [vmem:[%s304 + $0x10] sm:$0xf]
      %v309 = vld [vmem:[%s304 + $0x18] sm:$0xf]
      %v310 = vld [vmem:[%s304 + $0x1c] sm:$0xf]
      %v311 = vld [vmem:[%s304 + $0x24] sm:$0xf]
      %v312 = vld [vmem:[%s304 + $0x28] sm:$0xf]
      %v313 = vld [vmem:[%s304 + $0x30] sm:$0xf]
      %v314 = vld [vmem:[%s304 + $0x34] sm:$0xf]
      %v315 = vld [vmem:[%s304 + $0x3c] sm:$0xf]
      %v316 = vld [vmem:[%s304 + $0x40] sm:$0xf]
      %v317 = vld [vmem:[%s304 + $0x48] sm:$0xf]
      %v318 = vld [vmem:[%s304 + $0x4c] sm:$0xf]
      %v319 = vld [vmem:[%s304 + $0x54] sm:$0xf]
      %v320 = vld [vmem:[%s304 + $0x58] sm:$0xf]
      %v321 = vld [vmem:[%s304 + $0x60] sm:$0xf]
      %v322 = vld [vmem:[%s304 + $0x64] sm:$0xf]
      %v323 = vld [vmem:[%s304 + $0x6c] sm:$0xf]
      %v324 = vld [vmem:[%s304 + $0x70] sm:$0xf]
      %v325 = vld [vmem:[%s304 + $0x78] sm:$0xf]
      %v326 = vld [vmem:[%s304 + $0x7c] sm:$0xf]
      %v327 = vld [vmem:[%s304 + $0x84] sm:$0xf]
      %v328 = vld [vmem:[%s304 + $0x88] sm:$0xf]
      %v329 = vld [vmem:[%s304 + $0x90] sm:$0xf]
      %v330 = vld [vmem:[%s304 + $0x94] sm:$0xf]
      %v331 = vld [vmem:[%s304 + $0x9c] sm:$0xf]
      %v332 = vld [vmem:[%s304 + $0xa0] sm:$0xf]
      %v333 = vld [vmem:[%s304 + $0xa8] sm:$0xf]
      %v334 = vld [vmem:[%s304 + $0xac] sm:$0xf]
      %v335 = vld [vmem:[%s304 + $0xb4] sm:$0xf]
      %v336 = vld [vmem:[%s304 + $0xb8] sm:$0xf]
      %v337 = vld [vmem:[%s304 + $0x8] sm:$0x1]
      %v338 = vld [vmem:[%s304 + $0x14] sm:$0x1]
      %v339 = vld [vmem:[%s304 + $0x20] sm:$0x1]
      %v340 = vld [vmem:[%s304 + $0x2c] sm:$0x1]
      %v341 = vld [vmem:[%s304 + $0x38] sm:$0x1]
      %v342 = vld [vmem:[%s304 + $0x44] sm:$0x1]
      %v343 = vld [vmem:[%s304 + $0x50] sm:$0x1]
      %v344 = vld [vmem:[%s304 + $0x5c] sm:$0x1]
      %v345 = vld [vmem:[%s304 + $0x68] sm:$0x1]
      %v346 = vld [vmem:[%s304 + $0x74] sm:$0x1]
      %v347 = vld [vmem:[%s304 + $0x80] sm:$0x1]
      %v348 = vld [vmem:[%s304 + $0x8c] sm:$0x1]
      %v349 = vld [vmem:[%s304 + $0x98] sm:$0x1]
      %v350 = vld [vmem:[%s304 + $0xa4] sm:$0x1]
      %v351 = vld [vmem:[%s304 + $0xb0] sm:$0x1]
      %v352 = vld [vmem:[%s304 + $0xbc] sm:$0x1]
      %v353 = vld [vmem:[%s304] sm:$0xe]
      %v354 = vld [vmem:[%s304 + $0xc] sm:$0xe]
      %v355 = vld [vmem:[%s304 + $0x18] sm:$0xe]
      %v356 = vld [vmem:[%s304 + $0x24] sm:$0xe]
      %v357 = vld [vmem:[%s304 + $0x30] sm:$0xe]
      %v358 = vld [vmem:[%s304 + $0x3c] sm:$0xe]
      %v359 = vld [vmem:[%s304 + $0x48] sm:$0xe]
      %v360 = vld [vmem:[%s304 + $0x54] sm:$0xe]
      %v361 = vld [vmem:[%s304 + $0x60] sm:$0xe]
      %v362 = vld [vmem:[%s304 + $0x6c] sm:$0xe]
      %v363 = vld [vmem:[%s304 + $0x78] sm:$0xe]
      %v364 = vld [vmem:[%s304 + $0x84] sm:$0xe]
      %v365 = vld [vmem:[%s304 + $0x90] sm:$0xe]
      %v366 = vld [vmem:[%s304 + $0x9c] sm:$0xe]
      %v367 = vld [vmem:[%s304 + $0xa8] sm:$0xe]
      %v368 = vld [vmem:[%s304 + $0xb4] sm:$0xe]
      %s369 = scalar_lea.vmem %s219, 24
      %v370 = vld [vmem:[%s369] sm:$0xf]
      %v371 = vld [vmem:[%s369 + $0x4] sm:$0xf]
      %v372 = vld [vmem:[%s369 + $0xc] sm:$0xf]
      %v373 = vld [vmem:[%s369 + $0x10] sm:$0xf]
      %v374 = vld [vmem:[%s369 + $0x18] sm:$0xf]
      %v375 = vld [vmem:[%s369 + $0x1c] sm:$0xf]
      %v376 = vld [vmem:[%s369 + $0x24] sm:$0xf]
      %v377 = vld [vmem:[%s369 + $0x28] sm:$0xf]
      %v378 = vld [vmem:[%s369 + $0x30] sm:$0xf]
      %v379 = vld [vmem:[%s369 + $0x34] sm:$0xf]
      %v380 = vld [vmem:[%s369 + $0x3c] sm:$0xf]
      %v381 = vld [vmem:[%s369 + $0x40] sm:$0xf]
      %v382 = vld [vmem:[%s369 + $0x48] sm:$0xf]
      %v383 = vld [vmem:[%s369 + $0x4c] sm:$0xf]
      %v384 = vld [vmem:[%s369 + $0x54] sm:$0xf]
      %v385 = vld [vmem:[%s369 + $0x58] sm:$0xf]
      %v386 = vld [vmem:[%s369 + $0x60] sm:$0xf]
      %v387 = vld [vmem:[%s369 + $0x64] sm:$0xf]
      %v388 = vld [vmem:[%s369 + $0x6c] sm:$0xf]
      %v389 = vld [vmem:[%s369 + $0x70] sm:$0xf]
      %v390 = vld [vmem:[%s369 + $0x78] sm:$0xf]
      %v391 = vld [vmem:[%s369 + $0x7c] sm:$0xf]
      %v392 = vld [vmem:[%s369 + $0x84] sm:$0xf]
      %v393 = vld [vmem:[%s369 + $0x88] sm:$0xf]
      %v394 = vld [vmem:[%s369 + $0x90] sm:$0xf]
      %v395 = vld [vmem:[%s369 + $0x94] sm:$0xf]
      %v396 = vld [vmem:[%s369 + $0x9c] sm:$0xf]
      %v397 = vld [vmem:[%s369 + $0xa0] sm:$0xf]
      %v398 = vld [vmem:[%s369 + $0xa8] sm:$0xf]
      %v399 = vld [vmem:[%s369 + $0xac] sm:$0xf]
      %v400 = vld [vmem:[%s369 + $0xb4] sm:$0xf]
      %v401 = vld [vmem:[%s369 + $0xb8] sm:$0xf]
      %v402 = vld [vmem:[%s369 + $0x8] sm:$0x1]
      %v403 = vld [vmem:[%s369 + $0x14] sm:$0x1]
      %v404 = vld [vmem:[%s369 + $0x20] sm:$0x1]
      %v405 = vld [vmem:[%s369 + $0x2c] sm:$0x1]
      %v406 = vld [vmem:[%s369 + $0x38] sm:$0x1]
      %v407 = vld [vmem:[%s369 + $0x44] sm:$0x1]
      %v408 = vld [vmem:[%s369 + $0x50] sm:$0x1]
      %v409 = vld [vmem:[%s369 + $0x5c] sm:$0x1]
      %v410 = vld [vmem:[%s369 + $0x68] sm:$0x1]
      %v411 = vld [vmem:[%s369 + $0x74] sm:$0x1]
      %v412 = vld [vmem:[%s369 + $0x80] sm:$0x1]
      %v413 = vld [vmem:[%s369 + $0x8c] sm:$0x1]
      %v414 = vld [vmem:[%s369 + $0x98] sm:$0x1]
      %v415 = vld [vmem:[%s369 + $0xa4] sm:$0x1]
      %v416 = vld [vmem:[%s369 + $0xb0] sm:$0x1]
      %v417 = vld [vmem:[%s369 + $0xbc] sm:$0x1]
      %v418 = vld [vmem:[%s369] sm:$0xe]
      %v419 = vld [vmem:[%s369 + $0xc] sm:$0xe]
      %v420 = vld [vmem:[%s369 + $0x18] sm:$0xe]
      %v421 = vld [vmem:[%s369 + $0x24] sm:$0xe]
      %v422 = vld [vmem:[%s369 + $0x30] sm:$0xe]
      %v423 = vld [vmem:[%s369 + $0x3c] sm:$0xe]
      %v424 = vld [vmem:[%s369 + $0x48] sm:$0xe]
      %v425 = vld [vmem:[%s369 + $0x54] sm:$0xe]
      %v426 = vld [vmem:[%s369 + $0x60] sm:$0xe]
      %v427 = vld [vmem:[%s369 + $0x6c] sm:$0xe]
      %v428 = vld [vmem:[%s369 + $0x78] sm:$0xe]
      %v429 = vld [vmem:[%s369 + $0x84] sm:$0xe]
      %v430 = vld [vmem:[%s369 + $0x90] sm:$0xe]
      %v431 = vld [vmem:[%s369 + $0x9c] sm:$0xe]
      %v432 = vld [vmem:[%s369 + $0xa8] sm:$0xe]
      %v433 = vld [vmem:[%s369 + $0xb4] sm:$0xe]
      %v466 = vunpack.c.l.b16 %v240
      %v467 = vunpack.c.l.b16 %v241
      %v468 = vunpack.c.l.b16 %v242
      %v469 = vunpack.c.l.b16 %v243
      %v470 = vunpack.c.l.b16 %v244
      %v471 = vunpack.c.l.b16 %v245
      %v472 = vunpack.c.l.b16 %v246
      %v473 = vunpack.c.l.b16 %v247
      %v474 = vunpack.c.l.b16 %v248
      %v475 = vunpack.c.l.b16 %v249
      %v476 = vunpack.c.l.b16 %v250
      %v477 = vunpack.c.l.b16 %v251
      %v478 = vunpack.c.l.b16 %v252
      %v479 = vunpack.c.l.b16 %v253
      %v480 = vunpack.c.l.b16 %v254
      %v481 = vunpack.c.l.b16 %v255
      %v482 = vunpack.c.l.b16 %v256
      %v483 = vunpack.c.l.b16 %v257
      %v484 = vunpack.c.l.b16 %v258
      %v485 = vunpack.c.l.b16 %v259
      %v486 = vunpack.c.l.b16 %v260
      %v487 = vunpack.c.l.b16 %v261
      %v488 = vunpack.c.l.b16 %v262
      %v489 = vunpack.c.l.b16 %v263
      %v490 = vunpack.c.l.b16 %v264
      %v491 = vunpack.c.l.b16 %v265
      %v492 = vunpack.c.l.b16 %v266
      %v493 = vunpack.c.l.b16 %v267
      %v494 = vunpack.c.l.b16 %v268
      %v495 = vunpack.c.l.b16 %v269
      %v496 = vunpack.c.l.b16 %v270
      %v497 = vunpack.c.l.b16 %v271
      %v498 = vpack.c.b16 %v467, %v466
      %v499 = vpack.c.b16 %v469, %v468
      %v500 = vpack.c.b16 %v471, %v470
      %v501 = vpack.c.b16 %v473, %v472
      %v502 = vpack.c.b16 %v475, %v474
      %v503 = vpack.c.b16 %v477, %v476
      %v504 = vpack.c.b16 %v479, %v478
      %v505 = vpack.c.b16 %v481, %v480
      %v506 = vpack.c.b16 %v483, %v482
      %v507 = vpack.c.b16 %v485, %v484
      %v508 = vpack.c.b16 %v487, %v486
      %v509 = vpack.c.b16 %v489, %v488
      %v510 = vpack.c.b16 %v491, %v490
      %v511 = vpack.c.b16 %v493, %v492
      %v512 = vpack.c.b16 %v495, %v494
      %v513 = vpack.c.b16 %v497, %v496
      %v530 = vunpack.c.l.b16 %v272
      %v531 = vunpack.c.l.b16 %v273
      %v532 = vunpack.c.l.b16 %v274
      %v533 = vunpack.c.l.b16 %v275
      %v534 = vunpack.c.l.b16 %v276
      %v535 = vunpack.c.l.b16 %v277
      %v536 = vunpack.c.l.b16 %v278
      %v537 = vunpack.c.l.b16 %v279
      %v538 = vunpack.c.l.b16 %v280
      %v539 = vunpack.c.l.b16 %v281
      %v540 = vunpack.c.l.b16 %v282
      %v541 = vunpack.c.l.b16 %v283
      %v542 = vunpack.c.l.b16 %v284
      %v543 = vunpack.c.l.b16 %v285
      %v544 = vunpack.c.l.b16 %v286
      %v545 = vunpack.c.l.b16 %v287
      %v546 = vpack.c.b16 %v530, %v530
      %v547 = vpack.c.b16 %v531, %v531
      %v548 = vpack.c.b16 %v532, %v532
      %v549 = vpack.c.b16 %v533, %v533
      %v550 = vpack.c.b16 %v534, %v534
      %v551 = vpack.c.b16 %v535, %v535
      %v552 = vpack.c.b16 %v536, %v536
      %v553 = vpack.c.b16 %v537, %v537
      %v554 = vpack.c.b16 %v538, %v538
      %v555 = vpack.c.b16 %v539, %v539
      %v556 = vpack.c.b16 %v540, %v540
      %v557 = vpack.c.b16 %v541, %v541
      %v558 = vpack.c.b16 %v542, %v542
      %v559 = vpack.c.b16 %v543, %v543
      %v560 = vpack.c.b16 %v544, %v544
      %v561 = vpack.c.b16 %v545, %v545
      %vm562 = vsmask.f32 7424
      %v564 = vshrl.u32 %v498, 16
      %v566 = vshll.u32 %v498, 16
      %v568 = vrot.slane %v566, 1
      %v569 = vor.u32 %v564, %v568
      %v571 = vshll.u32 %v546, 16
      %v573 = vrot.slane %v571, 1
      %v574 = vsel %vm562, %v569, %v573
      %v576 = vshrl.u32 %v499, 16
      %v578 = vshll.u32 %v499, 16
      %v580 = vrot.slane %v578, 1
      %v581 = vor.u32 %v576, %v580
      %v583 = vshll.u32 %v547, 16
      %v585 = vrot.slane %v583, 1
      %v586 = vsel %vm562, %v581, %v585
      %v588 = vshrl.u32 %v500, 16
      %v590 = vshll.u32 %v500, 16
      %v592 = vrot.slane %v590, 1
      %v593 = vor.u32 %v588, %v592
      %v595 = vshll.u32 %v548, 16
      %v597 = vrot.slane %v595, 1
      %v598 = vsel %vm562, %v593, %v597
      %v600 = vshrl.u32 %v501, 16
      %v602 = vshll.u32 %v501, 16
      %v604 = vrot.slane %v602, 1
      %v605 = vor.u32 %v600, %v604
      %v607 = vshll.u32 %v549, 16
      %v609 = vrot.slane %v607, 1
      %v610 = vsel %vm562, %v605, %v609
      %v612 = vshrl.u32 %v502, 16
      %v614 = vshll.u32 %v502, 16
      %v616 = vrot.slane %v614, 1
      %v617 = vor.u32 %v612, %v616
      %v619 = vshll.u32 %v550, 16
      %v621 = vrot.slane %v619, 1
      %v622 = vsel %vm562, %v617, %v621
      %v624 = vshrl.u32 %v503, 16
      %v626 = vshll.u32 %v503, 16
      %v628 = vrot.slane %v626, 1
      %v629 = vor.u32 %v624, %v628
      %v631 = vshll.u32 %v551, 16
      %v633 = vrot.slane %v631, 1
      %v634 = vsel %vm562, %v629, %v633
      %v636 = vshrl.u32 %v504, 16
      %v638 = vshll.u32 %v504, 16
      %v640 = vrot.slane %v638, 1
      %v641 = vor.u32 %v636, %v640
      %v643 = vshll.u32 %v552, 16
      %v645 = vrot.slane %v643, 1
      %v646 = vsel %vm562, %v641, %v645
      %v648 = vshrl.u32 %v505, 16
      %v650 = vshll.u32 %v505, 16
      %v652 = vrot.slane %v650, 1
      %v653 = vor.u32 %v648, %v652
      %v655 = vshll.u32 %v553, 16
      %v657 = vrot.slane %v655, 1
      %v658 = vsel %vm562, %v653, %v657
      %v660 = vshrl.u32 %v506, 16
      %v662 = vshll.u32 %v506, 16
      %v664 = vrot.slane %v662, 1
      %v665 = vor.u32 %v660, %v664
      %v667 = vshll.u32 %v554, 16
      %v669 = vrot.slane %v667, 1
      %v670 = vsel %vm562, %v665, %v669
      %v672 = vshrl.u32 %v507, 16
      %v674 = vshll.u32 %v507, 16
      %v676 = vrot.slane %v674, 1
      %v677 = vor.u32 %v672, %v676
      %v679 = vshll.u32 %v555, 16
      %v681 = vrot.slane %v679, 1
      %v682 = vsel %vm562, %v677, %v681
      %v684 = vshrl.u32 %v508, 16
      %v686 = vshll.u32 %v508, 16
      %v688 = vrot.slane %v686, 1
      %v689 = vor.u32 %v684, %v688
      %v691 = vshll.u32 %v556, 16
      %v693 = vrot.slane %v691, 1
      %v694 = vsel %vm562, %v689, %v693
      %v696 = vshrl.u32 %v509, 16
      %v698 = vshll.u32 %v509, 16
      %v700 = vrot.slane %v698, 1
      %v701 = vor.u32 %v696, %v700
      %v703 = vshll.u32 %v557, 16
      %v705 = vrot.slane %v703, 1
      %v706 = vsel %vm562, %v701, %v705
      %v708 = vshrl.u32 %v510, 16
      %v710 = vshll.u32 %v510, 16
      %v712 = vrot.slane %v710, 1
      %v713 = vor.u32 %v708, %v712
      %v715 = vshll.u32 %v558, 16
      %v717 = vrot.slane %v715, 1
      %v718 = vsel %vm562, %v713, %v717
      %v720 = vshrl.u32 %v511, 16
      %v722 = vshll.u32 %v511, 16
      %v724 = vrot.slane %v722, 1
      %v725 = vor.u32 %v720, %v724
      %v727 = vshll.u32 %v559, 16
      %v729 = vrot.slane %v727, 1
      %v730 = vsel %vm562, %v725, %v729
      %v732 = vshrl.u32 %v512, 16
      %v734 = vshll.u32 %v512, 16
      %v736 = vrot.slane %v734, 1
      %v737 = vor.u32 %v732, %v736
      %v739 = vshll.u32 %v560, 16
      %v741 = vrot.slane %v739, 1
      %v742 = vsel %vm562, %v737, %v741
      %v744 = vshrl.u32 %v513, 16
      %v746 = vshll.u32 %v513, 16
      %v748 = vrot.slane %v746, 1
      %v749 = vor.u32 %v744, %v748
      %v751 = vshll.u32 %v561, 16
      %v753 = vrot.slane %v751, 1
      %v754 = vsel %vm562, %v749, %v753
      %755 = vrot.lane.b32.xlu0 %v574, 8
      %v756 = vpop.permute.xlu0 %755
      %757 = vrot.lane.b32.xlu0 %v586, 8
      %v758 = vpop.permute.xlu0 %757
      %759 = vrot.lane.b32.xlu0 %v598, 8
      %v760 = vpop.permute.xlu0 %759
      %761 = vrot.lane.b32.xlu0 %v610, 8
      %v762 = vpop.permute.xlu0 %761
      %763 = vrot.lane.b32.xlu0 %v622, 8
      %v764 = vpop.permute.xlu0 %763
      %765 = vrot.lane.b32.xlu0 %v634, 8
      %v766 = vpop.permute.xlu0 %765
      %767 = vrot.lane.b32.xlu0 %v646, 8
      %v768 = vpop.permute.xlu0 %767
      %769 = vrot.lane.b32.xlu0 %v658, 8
      %v770 = vpop.permute.xlu0 %769
      %771 = vrot.lane.b32.xlu0 %v670, 8
      %v772 = vpop.permute.xlu0 %771
      %773 = vrot.lane.b32.xlu0 %v682, 8
      %v774 = vpop.permute.xlu0 %773
      %775 = vrot.lane.b32.xlu0 %v694, 8
      %v776 = vpop.permute.xlu0 %775
      %777 = vrot.lane.b32.xlu0 %v706, 8
      %v778 = vpop.permute.xlu0 %777
      %779 = vrot.lane.b32.xlu0 %v718, 8
      %v780 = vpop.permute.xlu0 %779
      %781 = vrot.lane.b32.xlu0 %v730, 8
      %v782 = vpop.permute.xlu0 %781
      %783 = vrot.lane.b32.xlu0 %v742, 8
      %v784 = vpop.permute.xlu0 %783
      %785 = vrot.lane.b32.xlu0 %v754, 8
      %v786 = vpop.permute.xlu0 %785
      %v803 = vunpack.c.l.b16 %v288
      %v804 = vunpack.c.l.b16 %v289
      %v805 = vunpack.c.l.b16 %v290
      %v806 = vunpack.c.l.b16 %v291
      %v807 = vunpack.c.l.b16 %v292
      %v808 = vunpack.c.l.b16 %v293
      %v809 = vunpack.c.l.b16 %v294
      %v810 = vunpack.c.l.b16 %v295
      %v811 = vunpack.c.l.b16 %v296
      %v812 = vunpack.c.l.b16 %v297
      %v813 = vunpack.c.l.b16 %v298
      %v814 = vunpack.c.l.b16 %v299
      %v815 = vunpack.c.l.b16 %v300
      %v816 = vunpack.c.l.b16 %v301
      %v817 = vunpack.c.l.b16 %v302
      %v818 = vunpack.c.l.b16 %v303
      %v819 = vpack.c.b16 %v467, %v803
      %v820 = vpack.c.b16 %v469, %v804
      %v821 = vpack.c.b16 %v471, %v805
      %v822 = vpack.c.b16 %v473, %v806
      %v823 = vpack.c.b16 %v475, %v807
      %v824 = vpack.c.b16 %v477, %v808
      %v825 = vpack.c.b16 %v479, %v809
      %v826 = vpack.c.b16 %v481, %v810
      %v827 = vpack.c.b16 %v483, %v811
      %v828 = vpack.c.b16 %v485, %v812
      %v829 = vpack.c.b16 %v487, %v813
      %v830 = vpack.c.b16 %v489, %v814
      %v831 = vpack.c.b16 %v491, %v815
      %v832 = vpack.c.b16 %v493, %v816
      %v833 = vpack.c.b16 %v495, %v817
      %v834 = vpack.c.b16 %v497, %v818
      %vm835 = vcmask 1046528
      %v836 = vrot.slane %v819, 1
      %v837 = vrot.slane %v546, 1
      %v838 = vsel %vm835, %v836, %v837
      %v839 = vrot.slane %v820, 1
      %v840 = vrot.slane %v547, 1
      %v841 = vsel %vm835, %v839, %v840
      %v842 = vrot.slane %v821, 1
      %v843 = vrot.slane %v548, 1
      %v844 = vsel %vm835, %v842, %v843
      %v845 = vrot.slane %v822, 1
      %v846 = vrot.slane %v549, 1
      %v847 = vsel %vm835, %v845, %v846
      %v848 = vrot.slane %v823, 1
      %v849 = vrot.slane %v550, 1
      %v850 = vsel %vm835, %v848, %v849
      %v851 = vrot.slane %v824, 1
      %v852 = vrot.slane %v551, 1
      %v853 = vsel %vm835, %v851, %v852
      %v854 = vrot.slane %v825, 1
      %v855 = vrot.slane %v552, 1
      %v856 = vsel %vm835, %v854, %v855
      %v857 = vrot.slane %v826, 1
      %v858 = vrot.slane %v553, 1
      %v859 = vsel %vm835, %v857, %v858
      %v860 = vrot.slane %v827, 1
      %v861 = vrot.slane %v554, 1
      %v862 = vsel %vm835, %v860, %v861
      %v863 = vrot.slane %v828, 1
      %v864 = vrot.slane %v555, 1
      %v865 = vsel %vm835, %v863, %v864
      %v866 = vrot.slane %v829, 1
      %v867 = vrot.slane %v556, 1
      %v868 = vsel %vm835, %v866, %v867
      %v869 = vrot.slane %v830, 1
      %v870 = vrot.slane %v557, 1
      %v871 = vsel %vm835, %v869, %v870
      %v872 = vrot.slane %v831, 1
      %v873 = vrot.slane %v558, 1
      %v874 = vsel %vm835, %v872, %v873
      %v875 = vrot.slane %v832, 1
      %v876 = vrot.slane %v559, 1
      %v877 = vsel %vm835, %v875, %v876
      %v878 = vrot.slane %v833, 1
      %v879 = vrot.slane %v560, 1
      %v880 = vsel %vm835, %v878, %v879
      %v881 = vrot.slane %v834, 1
      %v882 = vrot.slane %v561, 1
      %v883 = vsel %vm835, %v881, %v882
      %884 = vrot.lane.b32.xlu0 %v838, 16
      %v885 = vpop.permute.xlu0 %884
      %886 = vrot.lane.b32.xlu0 %v841, 16
      %v887 = vpop.permute.xlu0 %886
      %888 = vrot.lane.b32.xlu0 %v844, 16
      %v889 = vpop.permute.xlu0 %888
      %890 = vrot.lane.b32.xlu0 %v847, 16
      %v891 = vpop.permute.xlu0 %890
      %892 = vrot.lane.b32.xlu0 %v850, 16
      %v893 = vpop.permute.xlu0 %892
      %894 = vrot.lane.b32.xlu0 %v853, 16
      %v895 = vpop.permute.xlu0 %894
      %896 = vrot.lane.b32.xlu0 %v856, 16
      %v897 = vpop.permute.xlu0 %896
      %898 = vrot.lane.b32.xlu0 %v859, 16
      %v899 = vpop.permute.xlu0 %898
      %900 = vrot.lane.b32.xlu0 %v862, 16
      %v901 = vpop.permute.xlu0 %900
      %902 = vrot.lane.b32.xlu0 %v865, 16
      %v903 = vpop.permute.xlu0 %902
      %904 = vrot.lane.b32.xlu0 %v868, 16
      %v905 = vpop.permute.xlu0 %904
      %906 = vrot.lane.b32.xlu0 %v871, 16
      %v907 = vpop.permute.xlu0 %906
      %908 = vrot.lane.b32.xlu0 %v874, 16
      %v909 = vpop.permute.xlu0 %908
      %910 = vrot.lane.b32.xlu0 %v877, 16
      %v911 = vpop.permute.xlu0 %910
      %912 = vrot.lane.b32.xlu0 %v880, 16
      %v913 = vpop.permute.xlu0 %912
      %914 = vrot.lane.b32.xlu0 %v883, 16
      %v915 = vpop.permute.xlu0 %914
      %v948 = vunpack.c.l.b16 %v305
      %v949 = vunpack.c.l.b16 %v306
      %v950 = vunpack.c.l.b16 %v307
      %v951 = vunpack.c.l.b16 %v308
      %v952 = vunpack.c.l.b16 %v309
      %v953 = vunpack.c.l.b16 %v310
      %v954 = vunpack.c.l.b16 %v311
      %v955 = vunpack.c.l.b16 %v312
      %v956 = vunpack.c.l.b16 %v313
      %v957 = vunpack.c.l.b16 %v314
      %v958 = vunpack.c.l.b16 %v315
      %v959 = vunpack.c.l.b16 %v316
      %v960 = vunpack.c.l.b16 %v317
      %v961 = vunpack.c.l.b16 %v318
      %v962 = vunpack.c.l.b16 %v319
      %v963 = vunpack.c.l.b16 %v320
      %v964 = vunpack.c.l.b16 %v321
      %v965 = vunpack.c.l.b16 %v322
      %v966 = vunpack.c.l.b16 %v323
      %v967 = vunpack.c.l.b16 %v324
      %v968 = vunpack.c.l.b16 %v325
      %v969 = vunpack.c.l.b16 %v326
      %v970 = vunpack.c.l.b16 %v327
      %v971 = vunpack.c.l.b16 %v328
      %v972 = vunpack.c.l.b16 %v329
      %v973 = vunpack.c.l.b16 %v330
      %v974 = vunpack.c.l.b16 %v331
      %v975 = vunpack.c.l.b16 %v332
      %v976 = vunpack.c.l.b16 %v333
      %v977 = vunpack.c.l.b16 %v334
      %v978 = vunpack.c.l.b16 %v335
      %v979 = vunpack.c.l.b16 %v336
      %v980 = vpack.c.b16 %v949, %v948
      %v981 = vpack.c.b16 %v951, %v950
      %v982 = vpack.c.b16 %v953, %v952
      %v983 = vpack.c.b16 %v955, %v954
      %v984 = vpack.c.b16 %v957, %v956
      %v985 = vpack.c.b16 %v959, %v958
      %v986 = vpack.c.b16 %v961, %v960
      %v987 = vpack.c.b16 %v963, %v962
      %v988 = vpack.c.b16 %v965, %v964
      %v989 = vpack.c.b16 %v967, %v966
      %v990 = vpack.c.b16 %v969, %v968
      %v991 = vpack.c.b16 %v971, %v970
      %v992 = vpack.c.b16 %v973, %v972
      %v993 = vpack.c.b16 %v975, %v974
      %v994 = vpack.c.b16 %v977, %v976
      %v995 = vpack.c.b16 %v979, %v978
      %996 = vrot.lane.b32.xlu0 %v980, 24
      %v997 = vpop.permute.xlu0 %996
      %998 = vrot.lane.b32.xlu0 %v981, 24
      %v999 = vpop.permute.xlu0 %998
      %1000 = vrot.lane.b32.xlu0 %v982, 24
      %v1001 = vpop.permute.xlu0 %1000
      %1002 = vrot.lane.b32.xlu0 %v983, 24
      %v1003 = vpop.permute.xlu0 %1002
      %1004 = vrot.lane.b32.xlu0 %v984, 24
      %v1005 = vpop.permute.xlu0 %1004
      %1006 = vrot.lane.b32.xlu0 %v985, 24
      %v1007 = vpop.permute.xlu0 %1006
      %1008 = vrot.lane.b32.xlu0 %v986, 24
      %v1009 = vpop.permute.xlu0 %1008
      %1010 = vrot.lane.b32.xlu0 %v987, 24
      %v1011 = vpop.permute.xlu0 %1010
      %1012 = vrot.lane.b32.xlu0 %v988, 24
      %v1013 = vpop.permute.xlu0 %1012
      %1014 = vrot.lane.b32.xlu0 %v989, 24
      %v1015 = vpop.permute.xlu0 %1014
      %1016 = vrot.lane.b32.xlu0 %v990, 24
      %v1017 = vpop.permute.xlu0 %1016
      %1018 = vrot.lane.b32.xlu0 %v991, 24
      %v1019 = vpop.permute.xlu0 %1018
      %1020 = vrot.lane.b32.xlu0 %v992, 24
      %v1021 = vpop.permute.xlu0 %1020
      %1022 = vrot.lane.b32.xlu0 %v993, 24
      %v1023 = vpop.permute.xlu0 %1022
      %1024 = vrot.lane.b32.xlu0 %v994, 24
      %v1025 = vpop.permute.xlu0 %1024
      %1026 = vrot.lane.b32.xlu0 %v995, 24
      %v1027 = vpop.permute.xlu0 %1026
      %v1044 = vunpack.c.l.b16 %v337
      %v1045 = vunpack.c.l.b16 %v338
      %v1046 = vunpack.c.l.b16 %v339
      %v1047 = vunpack.c.l.b16 %v340
      %v1048 = vunpack.c.l.b16 %v341
      %v1049 = vunpack.c.l.b16 %v342
      %v1050 = vunpack.c.l.b16 %v343
      %v1051 = vunpack.c.l.b16 %v344
      %v1052 = vunpack.c.l.b16 %v345
      %v1053 = vunpack.c.l.b16 %v346
      %v1054 = vunpack.c.l.b16 %v347
      %v1055 = vunpack.c.l.b16 %v348
      %v1056 = vunpack.c.l.b16 %v349
      %v1057 = vunpack.c.l.b16 %v350
      %v1058 = vunpack.c.l.b16 %v351
      %v1059 = vunpack.c.l.b16 %v352
      %v1060 = vpack.c.b16 %v1044, %v1044
      %v1061 = vpack.c.b16 %v1045, %v1045
      %v1062 = vpack.c.b16 %v1046, %v1046
      %v1063 = vpack.c.b16 %v1047, %v1047
      %v1064 = vpack.c.b16 %v1048, %v1048
      %v1065 = vpack.c.b16 %v1049, %v1049
      %v1066 = vpack.c.b16 %v1050, %v1050
      %v1067 = vpack.c.b16 %v1051, %v1051
      %v1068 = vpack.c.b16 %v1052, %v1052
      %v1069 = vpack.c.b16 %v1053, %v1053
      %v1070 = vpack.c.b16 %v1054, %v1054
      %v1071 = vpack.c.b16 %v1055, %v1055
      %v1072 = vpack.c.b16 %v1056, %v1056
      %v1073 = vpack.c.b16 %v1057, %v1057
      %v1074 = vpack.c.b16 %v1058, %v1058
      %v1075 = vpack.c.b16 %v1059, %v1059
      %v1077 = vshrl.u32 %v980, 16
      %v1079 = vshll.u32 %v980, 16
      %v1081 = vrot.slane %v1079, 1
      %v1082 = vor.u32 %v1077, %v1081
      %v1084 = vshll.u32 %v1060, 16
      %v1086 = vrot.slane %v1084, 1
      %v1087 = vsel %vm562, %v1082, %v1086
      %v1089 = vshrl.u32 %v981, 16
      %v1091 = vshll.u32 %v981, 16
      %v1093 = vrot.slane %v1091, 1
      %v1094 = vor.u32 %v1089, %v1093
      %v1096 = vshll.u32 %v1061, 16
      %v1098 = vrot.slane %v1096, 1
      %v1099 = vsel %vm562, %v1094, %v1098
      %v1101 = vshrl.u32 %v982, 16
      %v1103 = vshll.u32 %v982, 16
      %v1105 = vrot.slane %v1103, 1
      %v1106 = vor.u32 %v1101, %v1105
      %v1108 = vshll.u32 %v1062, 16
      %v1110 = vrot.slane %v1108, 1
      %v1111 = vsel %vm562, %v1106, %v1110
      %v1113 = vshrl.u32 %v983, 16
      %v1115 = vshll.u32 %v983, 16
      %v1117 = vrot.slane %v1115, 1
      %v1118 = vor.u32 %v1113, %v1117
      %v1120 = vshll.u32 %v1063, 16
      %v1122 = vrot.slane %v1120, 1
      %v1123 = vsel %vm562, %v1118, %v1122
      %v1125 = vshrl.u32 %v984, 16
      %v1127 = vshll.u32 %v984, 16
      %v1129 = vrot.slane %v1127, 1
      %v1130 = vor.u32 %v1125, %v1129
      %v1132 = vshll.u32 %v1064, 16
      %v1134 = vrot.slane %v1132, 1
      %v1135 = vsel %vm562, %v1130, %v1134
      %v1137 = vshrl.u32 %v985, 16
      %v1139 = vshll.u32 %v985, 16
      %v1141 = vrot.slane %v1139, 1
      %v1142 = vor.u32 %v1137, %v1141
      %v1144 = vshll.u32 %v1065, 16
      %v1146 = vrot.slane %v1144, 1
      %v1147 = vsel %vm562, %v1142, %v1146
      %v1149 = vshrl.u32 %v986, 16
      %v1151 = vshll.u32 %v986, 16
      %v1153 = vrot.slane %v1151, 1
      %v1154 = vor.u32 %v1149, %v1153
      %v1156 = vshll.u32 %v1066, 16
      %v1158 = vrot.slane %v1156, 1
      %v1159 = vsel %vm562, %v1154, %v1158
      %v1161 = vshrl.u32 %v987, 16
      %v1163 = vshll.u32 %v987, 16
      %v1165 = vrot.slane %v1163, 1
      %v1166 = vor.u32 %v1161, %v1165
      %v1168 = vshll.u32 %v1067, 16
      %v1170 = vrot.slane %v1168, 1
      %v1171 = vsel %vm562, %v1166, %v1170
      %v1173 = vshrl.u32 %v988, 16
      %v1175 = vshll.u32 %v988, 16
      %v1177 = vrot.slane %v1175, 1
      %v1178 = vor.u32 %v1173, %v1177
      %v1180 = vshll.u32 %v1068, 16
      %v1182 = vrot.slane %v1180, 1
      %v1183 = vsel %vm562, %v1178, %v1182
      %v1185 = vshrl.u32 %v989, 16
      %v1187 = vshll.u32 %v989, 16
      %v1189 = vrot.slane %v1187, 1
      %v1190 = vor.u32 %v1185, %v1189
      %v1192 = vshll.u32 %v1069, 16
      %v1194 = vrot.slane %v1192, 1
      %v1195 = vsel %vm562, %v1190, %v1194
      %v1197 = vshrl.u32 %v990, 16
      %v1199 = vshll.u32 %v990, 16
      %v1201 = vrot.slane %v1199, 1
      %v1202 = vor.u32 %v1197, %v1201
      %v1204 = vshll.u32 %v1070, 16
      %v1206 = vrot.slane %v1204, 1
      %v1207 = vsel %vm562, %v1202, %v1206
      %v1209 = vshrl.u32 %v991, 16
      %v1211 = vshll.u32 %v991, 16
      %v1213 = vrot.slane %v1211, 1
      %v1214 = vor.u32 %v1209, %v1213
      %v1216 = vshll.u32 %v1071, 16
      %v1218 = vrot.slane %v1216, 1
      %v1219 = vsel %vm562, %v1214, %v1218
      %v1221 = vshrl.u32 %v992, 16
      %v1223 = vshll.u32 %v992, 16
      %v1225 = vrot.slane %v1223, 1
      %v1226 = vor.u32 %v1221, %v1225
      %v1228 = vshll.u32 %v1072, 16
      %v1230 = vrot.slane %v1228, 1
      %v1231 = vsel %vm562, %v1226, %v1230
      %v1233 = vshrl.u32 %v993, 16
      %v1235 = vshll.u32 %v993, 16
      %v1237 = vrot.slane %v1235, 1
      %v1238 = vor.u32 %v1233, %v1237
      %v1240 = vshll.u32 %v1073, 16
      %v1242 = vrot.slane %v1240, 1
      %v1243 = vsel %vm562, %v1238, %v1242
      %v1245 = vshrl.u32 %v994, 16
      %v1247 = vshll.u32 %v994, 16
      %v1249 = vrot.slane %v1247, 1
      %v1250 = vor.u32 %v1245, %v1249
      %v1252 = vshll.u32 %v1074, 16
      %v1254 = vrot.slane %v1252, 1
      %v1255 = vsel %vm562, %v1250, %v1254
      %v1257 = vshrl.u32 %v995, 16
      %v1259 = vshll.u32 %v995, 16
      %v1261 = vrot.slane %v1259, 1
      %v1262 = vor.u32 %v1257, %v1261
      %v1264 = vshll.u32 %v1075, 16
      %v1266 = vrot.slane %v1264, 1
      %v1267 = vsel %vm562, %v1262, %v1266
      %1268 = vrot.lane.b32.xlu0 %v1087, 32
      %v1269 = vpop.permute.xlu0 %1268
      %1270 = vrot.lane.b32.xlu0 %v1099, 32
      %v1271 = vpop.permute.xlu0 %1270
      %1272 = vrot.lane.b32.xlu0 %v1111, 32
      %v1273 = vpop.permute.xlu0 %1272
      %1274 = vrot.lane.b32.xlu0 %v1123, 32
      %v1275 = vpop.permute.xlu0 %1274
      %1276 = vrot.lane.b32.xlu0 %v1135, 32
      %v1277 = vpop.permute.xlu0 %1276
      %1278 = vrot.lane.b32.xlu0 %v1147, 32
      %v1279 = vpop.permute.xlu0 %1278
      %1280 = vrot.lane.b32.xlu0 %v1159, 32
      %v1281 = vpop.permute.xlu0 %1280
      %1282 = vrot.lane.b32.xlu0 %v1171, 32
      %v1283 = vpop.permute.xlu0 %1282
      %1284 = vrot.lane.b32.xlu0 %v1183, 32
      %v1285 = vpop.permute.xlu0 %1284
      %1286 = vrot.lane.b32.xlu0 %v1195, 32
      %v1287 = vpop.permute.xlu0 %1286
      %1288 = vrot.lane.b32.xlu0 %v1207, 32
      %v1289 = vpop.permute.xlu0 %1288
      %1290 = vrot.lane.b32.xlu0 %v1219, 32
      %v1291 = vpop.permute.xlu0 %1290
      %1292 = vrot.lane.b32.xlu0 %v1231, 32
      %v1293 = vpop.permute.xlu0 %1292
      %1294 = vrot.lane.b32.xlu0 %v1243, 32
      %v1295 = vpop.permute.xlu0 %1294
      %1296 = vrot.lane.b32.xlu0 %v1255, 32
      %v1297 = vpop.permute.xlu0 %1296
      %1298 = vrot.lane.b32.xlu0 %v1267, 32
      %v1299 = vpop.permute.xlu0 %1298
      %v1316 = vunpack.c.l.b16 %v353
      %v1317 = vunpack.c.l.b16 %v354
      %v1318 = vunpack.c.l.b16 %v355
      %v1319 = vunpack.c.l.b16 %v356
      %v1320 = vunpack.c.l.b16 %v357
      %v1321 = vunpack.c.l.b16 %v358
      %v1322 = vunpack.c.l.b16 %v359
      %v1323 = vunpack.c.l.b16 %v360
      %v1324 = vunpack.c.l.b16 %v361
      %v1325 = vunpack.c.l.b16 %v362
      %v1326 = vunpack.c.l.b16 %v363
      %v1327 = vunpack.c.l.b16 %v364
      %v1328 = vunpack.c.l.b16 %v365
      %v1329 = vunpack.c.l.b16 %v366
      %v1330 = vunpack.c.l.b16 %v367
      %v1331 = vunpack.c.l.b16 %v368
      %v1332 = vpack.c.b16 %v949, %v1316
      %v1333 = vpack.c.b16 %v951, %v1317
      %v1334 = vpack.c.b16 %v953, %v1318
      %v1335 = vpack.c.b16 %v955, %v1319
      %v1336 = vpack.c.b16 %v957, %v1320
      %v1337 = vpack.c.b16 %v959, %v1321
      %v1338 = vpack.c.b16 %v961, %v1322
      %v1339 = vpack.c.b16 %v963, %v1323
      %v1340 = vpack.c.b16 %v965, %v1324
      %v1341 = vpack.c.b16 %v967, %v1325
      %v1342 = vpack.c.b16 %v969, %v1326
      %v1343 = vpack.c.b16 %v971, %v1327
      %v1344 = vpack.c.b16 %v973, %v1328
      %v1345 = vpack.c.b16 %v975, %v1329
      %v1346 = vpack.c.b16 %v977, %v1330
      %v1347 = vpack.c.b16 %v979, %v1331
      %v1348 = vrot.slane %v1332, 1
      %v1349 = vrot.slane %v1060, 1
      %v1350 = vsel %vm835, %v1348, %v1349
      %v1351 = vrot.slane %v1333, 1
      %v1352 = vrot.slane %v1061, 1
      %v1353 = vsel %vm835, %v1351, %v1352
      %v1354 = vrot.slane %v1334, 1
      %v1355 = vrot.slane %v1062, 1
      %v1356 = vsel %vm835, %v1354, %v1355
      %v1357 = vrot.slane %v1335, 1
      %v1358 = vrot.slane %v1063, 1
      %v1359 = vsel %vm835, %v1357, %v1358
      %v1360 = vrot.slane %v1336, 1
      %v1361 = vrot.slane %v1064, 1
      %v1362 = vsel %vm835, %v1360, %v1361
      %v1363 = vrot.slane %v1337, 1
      %v1364 = vrot.slane %v1065, 1
      %v1365 = vsel %vm835, %v1363, %v1364
      %v1366 = vrot.slane %v1338, 1
      %v1367 = vrot.slane %v1066, 1
      %v1368 = vsel %vm835, %v1366, %v1367
      %v1369 = vrot.slane %v1339, 1
      %v1370 = vrot.slane %v1067, 1
      %v1371 = vsel %vm835, %v1369, %v1370
      %v1372 = vrot.slane %v1340, 1
      %v1373 = vrot.slane %v1068, 1
      %v1374 = vsel %vm835, %v1372, %v1373
      %v1375 = vrot.slane %v1341, 1
      %v1376 = vrot.slane %v1069, 1
      %v1377 = vsel %vm835, %v1375, %v1376
      %v1378 = vrot.slane %v1342, 1
      %v1379 = vrot.slane %v1070, 1
      %v1380 = vsel %vm835, %v1378, %v1379
      %v1381 = vrot.slane %v1343, 1
      %v1382 = vrot.slane %v1071, 1
      %v1383 = vsel %vm835, %v1381, %v1382
      %v1384 = vrot.slane %v1344, 1
      %v1385 = vrot.slane %v1072, 1
      %v1386 = vsel %vm835, %v1384, %v1385
      %v1387 = vrot.slane %v1345, 1
      %v1388 = vrot.slane %v1073, 1
      %v1389 = vsel %vm835, %v1387, %v1388
      %v1390 = vrot.slane %v1346, 1
      %v1391 = vrot.slane %v1074, 1
      %v1392 = vsel %vm835, %v1390, %v1391
      %v1393 = vrot.slane %v1347, 1
      %v1394 = vrot.slane %v1075, 1
      %v1395 = vsel %vm835, %v1393, %v1394
      %1396 = vrot.lane.b32.xlu0 %v1350, 40
      %v1397 = vpop.permute.xlu0 %1396
      %1398 = vrot.lane.b32.xlu0 %v1353, 40
      %v1399 = vpop.permute.xlu0 %1398
      %1400 = vrot.lane.b32.xlu0 %v1356, 40
      %v1401 = vpop.permute.xlu0 %1400
      %1402 = vrot.lane.b32.xlu0 %v1359, 40
      %v1403 = vpop.permute.xlu0 %1402
      %1404 = vrot.lane.b32.xlu0 %v1362, 40
      %v1405 = vpop.permute.xlu0 %1404
      %1406 = vrot.lane.b32.xlu0 %v1365, 40
      %v1407 = vpop.permute.xlu0 %1406
      %1408 = vrot.lane.b32.xlu0 %v1368, 40
      %v1409 = vpop.permute.xlu0 %1408
      %1410 = vrot.lane.b32.xlu0 %v1371, 40
      %v1411 = vpop.permute.xlu0 %1410
      %1412 = vrot.lane.b32.xlu0 %v1374, 40
      %v1413 = vpop.permute.xlu0 %1412
      %1414 = vrot.lane.b32.xlu0 %v1377, 40
      %v1415 = vpop.permute.xlu0 %1414
      %1416 = vrot.lane.b32.xlu0 %v1380, 40
      %v1417 = vpop.permute.xlu0 %1416
      %1418 = vrot.lane.b32.xlu0 %v1383, 40
      %v1419 = vpop.permute.xlu0 %1418
      %1420 = vrot.lane.b32.xlu0 %v1386, 40
      %v1421 = vpop.permute.xlu0 %1420
      %1422 = vrot.lane.b32.xlu0 %v1389, 40
      %v1423 = vpop.permute.xlu0 %1422
      %1424 = vrot.lane.b32.xlu0 %v1392, 40
      %v1425 = vpop.permute.xlu0 %1424
      %1426 = vrot.lane.b32.xlu0 %v1395, 40
      %v1427 = vpop.permute.xlu0 %1426
      %v1460 = vunpack.c.l.b16 %v370
      %v1461 = vunpack.c.l.b16 %v371
      %v1462 = vunpack.c.l.b16 %v372
      %v1463 = vunpack.c.l.b16 %v373
      %v1464 = vunpack.c.l.b16 %v374
      %v1465 = vunpack.c.l.b16 %v375
      %v1466 = vunpack.c.l.b16 %v376
      %v1467 = vunpack.c.l.b16 %v377
      %v1468 = vunpack.c.l.b16 %v378
      %v1469 = vunpack.c.l.b16 %v379
      %v1470 = vunpack.c.l.b16 %v380
      %v1471 = vunpack.c.l.b16 %v381
      %v1472 = vunpack.c.l.b16 %v382
      %v1473 = vunpack.c.l.b16 %v383
      %v1474 = vunpack.c.l.b16 %v384
      %v1475 = vunpack.c.l.b16 %v385
      %v1476 = vunpack.c.l.b16 %v386
      %v1477 = vunpack.c.l.b16 %v387
      %v1478 = vunpack.c.l.b16 %v388
      %v1479 = vunpack.c.l.b16 %v389
      %v1480 = vunpack.c.l.b16 %v390
      %v1481 = vunpack.c.l.b16 %v391
      %v1482 = vunpack.c.l.b16 %v392
      %v1483 = vunpack.c.l.b16 %v393
      %v1484 = vunpack.c.l.b16 %v394
      %v1485 = vunpack.c.l.b16 %v395
      %v1486 = vunpack.c.l.b16 %v396
      %v1487 = vunpack.c.l.b16 %v397
      %v1488 = vunpack.c.l.b16 %v398
      %v1489 = vunpack.c.l.b16 %v399
      %v1490 = vunpack.c.l.b16 %v400
      %v1491 = vunpack.c.l.b16 %v401
      %v1492 = vpack.c.b16 %v1461, %v1460
      %v1493 = vpack.c.b16 %v1463, %v1462
      %v1494 = vpack.c.b16 %v1465, %v1464
      %v1495 = vpack.c.b16 %v1467, %v1466
      %v1496 = vpack.c.b16 %v1469, %v1468
      %v1497 = vpack.c.b16 %v1471, %v1470
      %v1498 = vpack.c.b16 %v1473, %v1472
      %v1499 = vpack.c.b16 %v1475, %v1474
      %v1500 = vpack.c.b16 %v1477, %v1476
      %v1501 = vpack.c.b16 %v1479, %v1478
      %v1502 = vpack.c.b16 %v1481, %v1480
      %v1503 = vpack.c.b16 %v1483, %v1482
      %v1504 = vpack.c.b16 %v1485, %v1484
      %v1505 = vpack.c.b16 %v1487, %v1486
      %v1506 = vpack.c.b16 %v1489, %v1488
      %v1507 = vpack.c.b16 %v1491, %v1490
      %1508 = vrot.lane.b32.xlu0 %v1492, 48
      %v1509 = vpop.permute.xlu0 %1508
      %1510 = vrot.lane.b32.xlu0 %v1493, 48
      %v1511 = vpop.permute.xlu0 %1510
      %1512 = vrot.lane.b32.xlu0 %v1494, 48
      %v1513 = vpop.permute.xlu0 %1512
      %1514 = vrot.lane.b32.xlu0 %v1495, 48
      %v1515 = vpop.permute.xlu0 %1514
      %1516 = vrot.lane.b32.xlu0 %v1496, 48
      %v1517 = vpop.permute.xlu0 %1516
      %1518 = vrot.lane.b32.xlu0 %v1497, 48
      %v1519 = vpop.permute.xlu0 %1518
      %1520 = vrot.lane.b32.xlu0 %v1498, 48
      %v1521 = vpop.permute.xlu0 %1520
      %1522 = vrot.lane.b32.xlu0 %v1499, 48
      %v1523 = vpop.permute.xlu0 %1522
      %1524 = vrot.lane.b32.xlu0 %v1500, 48
      %v1525 = vpop.permute.xlu0 %1524
      %1526 = vrot.lane.b32.xlu0 %v1501, 48
      %v1527 = vpop.permute.xlu0 %1526
      %1528 = vrot.lane.b32.xlu0 %v1502, 48
      %v1529 = vpop.permute.xlu0 %1528
      %1530 = vrot.lane.b32.xlu0 %v1503, 48
      %v1531 = vpop.permute.xlu0 %1530
      %1532 = vrot.lane.b32.xlu0 %v1504, 48
      %v1533 = vpop.permute.xlu0 %1532
      %1534 = vrot.lane.b32.xlu0 %v1505, 48
      %v1535 = vpop.permute.xlu0 %1534
      %1536 = vrot.lane.b32.xlu0 %v1506, 48
      %v1537 = vpop.permute.xlu0 %1536
      %1538 = vrot.lane.b32.xlu0 %v1507, 48
      %v1539 = vpop.permute.xlu0 %1538
      %v1556 = vunpack.c.l.b16 %v402
      %v1557 = vunpack.c.l.b16 %v403
      %v1558 = vunpack.c.l.b16 %v404
      %v1559 = vunpack.c.l.b16 %v405
      %v1560 = vunpack.c.l.b16 %v406
      %v1561 = vunpack.c.l.b16 %v407
      %v1562 = vunpack.c.l.b16 %v408
      %v1563 = vunpack.c.l.b16 %v409
      %v1564 = vunpack.c.l.b16 %v410
      %v1565 = vunpack.c.l.b16 %v411
      %v1566 = vunpack.c.l.b16 %v412
      %v1567 = vunpack.c.l.b16 %v413
      %v1568 = vunpack.c.l.b16 %v414
      %v1569 = vunpack.c.l.b16 %v415
      %v1570 = vunpack.c.l.b16 %v416
      %v1571 = vunpack.c.l.b16 %v417
      %v1572 = vpack.c.b16 %v1556, %v1556
      %v1573 = vpack.c.b16 %v1557, %v1557
      %v1574 = vpack.c.b16 %v1558, %v1558
      %v1575 = vpack.c.b16 %v1559, %v1559
      %v1576 = vpack.c.b16 %v1560, %v1560
      %v1577 = vpack.c.b16 %v1561, %v1561
      %v1578 = vpack.c.b16 %v1562, %v1562
      %v1579 = vpack.c.b16 %v1563, %v1563
      %v1580 = vpack.c.b16 %v1564, %v1564
      %v1581 = vpack.c.b16 %v1565, %v1565
      %v1582 = vpack.c.b16 %v1566, %v1566
      %v1583 = vpack.c.b16 %v1567, %v1567
      %v1584 = vpack.c.b16 %v1568, %v1568
      %v1585 = vpack.c.b16 %v1569, %v1569
      %v1586 = vpack.c.b16 %v1570, %v1570
      %v1587 = vpack.c.b16 %v1571, %v1571
      %v1589 = vshrl.u32 %v1492, 16
      %v1591 = vshll.u32 %v1492, 16
      %v1593 = vrot.slane %v1591, 1
      %v1594 = vor.u32 %v1589, %v1593
      %v1596 = vshll.u32 %v1572, 16
      %v1598 = vrot.slane %v1596, 1
      %v1599 = vsel %vm562, %v1594, %v1598
      %v1601 = vshrl.u32 %v1493, 16
      %v1603 = vshll.u32 %v1493, 16
      %v1605 = vrot.slane %v1603, 1
      %v1606 = vor.u32 %v1601, %v1605
      %v1608 = vshll.u32 %v1573, 16
      %v1610 = vrot.slane %v1608, 1
      %v1611 = vsel %vm562, %v1606, %v1610
      %v1613 = vshrl.u32 %v1494, 16
      %v1615 = vshll.u32 %v1494, 16
      %v1617 = vrot.slane %v1615, 1
      %v1618 = vor.u32 %v1613, %v1617
      %v1620 = vshll.u32 %v1574, 16
      %v1622 = vrot.slane %v1620, 1
      %v1623 = vsel %vm562, %v1618, %v1622
      %v1625 = vshrl.u32 %v1495, 16
      %v1627 = vshll.u32 %v1495, 16
      %v1629 = vrot.slane %v1627, 1
      %v1630 = vor.u32 %v1625, %v1629
      %v1632 = vshll.u32 %v1575, 16
      %v1634 = vrot.slane %v1632, 1
      %v1635 = vsel %vm562, %v1630, %v1634
      %v1637 = vshrl.u32 %v1496, 16
      %v1639 = vshll.u32 %v1496, 16
      %v1641 = vrot.slane %v1639, 1
      %v1642 = vor.u32 %v1637, %v1641
      %v1644 = vshll.u32 %v1576, 16
      %v1646 = vrot.slane %v1644, 1
      %v1647 = vsel %vm562, %v1642, %v1646
      %v1649 = vshrl.u32 %v1497, 16
      %v1651 = vshll.u32 %v1497, 16
      %v1653 = vrot.slane %v1651, 1
      %v1654 = vor.u32 %v1649, %v1653
      %v1656 = vshll.u32 %v1577, 16
      %v1658 = vrot.slane %v1656, 1
      %v1659 = vsel %vm562, %v1654, %v1658
      %v1661 = vshrl.u32 %v1498, 16
      %v1663 = vshll.u32 %v1498, 16
      %v1665 = vrot.slane %v1663, 1
      %v1666 = vor.u32 %v1661, %v1665
      %v1668 = vshll.u32 %v1578, 16
      %v1670 = vrot.slane %v1668, 1
      %v1671 = vsel %vm562, %v1666, %v1670
      %v1673 = vshrl.u32 %v1499, 16
      %v1675 = vshll.u32 %v1499, 16
      %v1677 = vrot.slane %v1675, 1
      %v1678 = vor.u32 %v1673, %v1677
      %v1680 = vshll.u32 %v1579, 16
      %v1682 = vrot.slane %v1680, 1
      %v1683 = vsel %vm562, %v1678, %v1682
      %v1685 = vshrl.u32 %v1500, 16
      %v1687 = vshll.u32 %v1500, 16
      %v1689 = vrot.slane %v1687, 1
      %v1690 = vor.u32 %v1685, %v1689
      %v1692 = vshll.u32 %v1580, 16
      %v1694 = vrot.slane %v1692, 1
      %v1695 = vsel %vm562, %v1690, %v1694
      %v1697 = vshrl.u32 %v1501, 16
      %v1699 = vshll.u32 %v1501, 16
      %v1701 = vrot.slane %v1699, 1
      %v1702 = vor.u32 %v1697, %v1701
      %v1704 = vshll.u32 %v1581, 16
      %v1706 = vrot.slane %v1704, 1
      %v1707 = vsel %vm562, %v1702, %v1706
      %v1709 = vshrl.u32 %v1502, 16
      %v1711 = vshll.u32 %v1502, 16
      %v1713 = vrot.slane %v1711, 1
      %v1714 = vor.u32 %v1709, %v1713
      %v1716 = vshll.u32 %v1582, 16
      %v1718 = vrot.slane %v1716, 1
      %v1719 = vsel %vm562, %v1714, %v1718
      %v1721 = vshrl.u32 %v1503, 16
      %v1723 = vshll.u32 %v1503, 16
      %v1725 = vrot.slane %v1723, 1
      %v1726 = vor.u32 %v1721, %v1725
      %v1728 = vshll.u32 %v1583, 16
      %v1730 = vrot.slane %v1728, 1
      %v1731 = vsel %vm562, %v1726, %v1730
      %v1733 = vshrl.u32 %v1504, 16
      %v1735 = vshll.u32 %v1504, 16
      %v1737 = vrot.slane %v1735, 1
      %v1738 = vor.u32 %v1733, %v1737
      %v1740 = vshll.u32 %v1584, 16
      %v1742 = vrot.slane %v1740, 1
      %v1743 = vsel %vm562, %v1738, %v1742
      %v1745 = vshrl.u32 %v1505, 16
      %v1747 = vshll.u32 %v1505, 16
      %v1749 = vrot.slane %v1747, 1
      %v1750 = vor.u32 %v1745, %v1749
      %v1752 = vshll.u32 %v1585, 16
      %v1754 = vrot.slane %v1752, 1
      %v1755 = vsel %vm562, %v1750, %v1754
      %v1757 = vshrl.u32 %v1506, 16
      %v1759 = vshll.u32 %v1506, 16
      %v1761 = vrot.slane %v1759, 1
      %v1762 = vor.u32 %v1757, %v1761
      %v1764 = vshll.u32 %v1586, 16
      %v1766 = vrot.slane %v1764, 1
      %v1767 = vsel %vm562, %v1762, %v1766
      %v1769 = vshrl.u32 %v1507, 16
      %v1771 = vshll.u32 %v1507, 16
      %v1773 = vrot.slane %v1771, 1
      %v1774 = vor.u32 %v1769, %v1773
      %v1776 = vshll.u32 %v1587, 16
      %v1778 = vrot.slane %v1776, 1
      %v1779 = vsel %vm562, %v1774, %v1778
      %1780 = vrot.lane.b32.xlu0 %v1599, 56
      %v1781 = vpop.permute.xlu0 %1780
      %1782 = vrot.lane.b32.xlu0 %v1611, 56
      %v1783 = vpop.permute.xlu0 %1782
      %1784 = vrot.lane.b32.xlu0 %v1623, 56
      %v1785 = vpop.permute.xlu0 %1784
      %1786 = vrot.lane.b32.xlu0 %v1635, 56
      %v1787 = vpop.permute.xlu0 %1786
      %1788 = vrot.lane.b32.xlu0 %v1647, 56
      %v1789 = vpop.permute.xlu0 %1788
      %1790 = vrot.lane.b32.xlu0 %v1659, 56
      %v1791 = vpop.permute.xlu0 %1790
      %1792 = vrot.lane.b32.xlu0 %v1671, 56
      %v1793 = vpop.permute.xlu0 %1792
      %1794 = vrot.lane.b32.xlu0 %v1683, 56
      %v1795 = vpop.permute.xlu0 %1794
      %1796 = vrot.lane.b32.xlu0 %v1695, 56
      %v1797 = vpop.permute.xlu0 %1796
      %1798 = vrot.lane.b32.xlu0 %v1707, 56
      %v1799 = vpop.permute.xlu0 %1798
      %1800 = vrot.lane.b32.xlu0 %v1719, 56
      %v1801 = vpop.permute.xlu0 %1800
      %1802 = vrot.lane.b32.xlu0 %v1731, 56
      %v1803 = vpop.permute.xlu0 %1802
      %1804 = vrot.lane.b32.xlu0 %v1743, 56
      %v1805 = vpop.permute.xlu0 %1804
      %1806 = vrot.lane.b32.xlu0 %v1755, 56
      %v1807 = vpop.permute.xlu0 %1806
      %1808 = vrot.lane.b32.xlu0 %v1767, 56
      %v1809 = vpop.permute.xlu0 %1808
      %1810 = vrot.lane.b32.xlu0 %v1779, 56
      %v1811 = vpop.permute.xlu0 %1810
      %v1828 = vunpack.c.l.b16 %v418
      %v1829 = vunpack.c.l.b16 %v419
      %v1830 = vunpack.c.l.b16 %v420
      %v1831 = vunpack.c.l.b16 %v421
      %v1832 = vunpack.c.l.b16 %v422
      %v1833 = vunpack.c.l.b16 %v423
      %v1834 = vunpack.c.l.b16 %v424
      %v1835 = vunpack.c.l.b16 %v425
      %v1836 = vunpack.c.l.b16 %v426
      %v1837 = vunpack.c.l.b16 %v427
      %v1838 = vunpack.c.l.b16 %v428
      %v1839 = vunpack.c.l.b16 %v429
      %v1840 = vunpack.c.l.b16 %v430
      %v1841 = vunpack.c.l.b16 %v431
      %v1842 = vunpack.c.l.b16 %v432
      %v1843 = vunpack.c.l.b16 %v433
      %v1844 = vpack.c.b16 %v1461, %v1828
      %v1845 = vpack.c.b16 %v1463, %v1829
      %v1846 = vpack.c.b16 %v1465, %v1830
      %v1847 = vpack.c.b16 %v1467, %v1831
      %v1848 = vpack.c.b16 %v1469, %v1832
      %v1849 = vpack.c.b16 %v1471, %v1833
      %v1850 = vpack.c.b16 %v1473, %v1834
      %v1851 = vpack.c.b16 %v1475, %v1835
      %v1852 = vpack.c.b16 %v1477, %v1836
      %v1853 = vpack.c.b16 %v1479, %v1837
      %v1854 = vpack.c.b16 %v1481, %v1838
      %v1855 = vpack.c.b16 %v1483, %v1839
      %v1856 = vpack.c.b16 %v1485, %v1840
      %v1857 = vpack.c.b16 %v1487, %v1841
      %v1858 = vpack.c.b16 %v1489, %v1842
      %v1859 = vpack.c.b16 %v1491, %v1843
      %v1860 = vrot.slane %v1844, 1
      %v1861 = vrot.slane %v1572, 1
      %v1862 = vsel %vm835, %v1860, %v1861
      %v1863 = vrot.slane %v1845, 1
      %v1864 = vrot.slane %v1573, 1
      %v1865 = vsel %vm835, %v1863, %v1864
      %v1866 = vrot.slane %v1846, 1
      %v1867 = vrot.slane %v1574, 1
      %v1868 = vsel %vm835, %v1866, %v1867
      %v1869 = vrot.slane %v1847, 1
      %v1870 = vrot.slane %v1575, 1
      %v1871 = vsel %vm835, %v1869, %v1870
      %v1872 = vrot.slane %v1848, 1
      %v1873 = vrot.slane %v1576, 1
      %v1874 = vsel %vm835, %v1872, %v1873
      %v1875 = vrot.slane %v1849, 1
      %v1876 = vrot.slane %v1577, 1
      %v1877 = vsel %vm835, %v1875, %v1876
      %v1878 = vrot.slane %v1850, 1
      %v1879 = vrot.slane %v1578, 1
      %v1880 = vsel %vm835, %v1878, %v1879
      %v1881 = vrot.slane %v1851, 1
      %v1882 = vrot.slane %v1579, 1
      %v1883 = vsel %vm835, %v1881, %v1882
      %v1884 = vrot.slane %v1852, 1
      %v1885 = vrot.slane %v1580, 1
      %v1886 = vsel %vm835, %v1884, %v1885
      %v1887 = vrot.slane %v1853, 1
      %v1888 = vrot.slane %v1581, 1
      %v1889 = vsel %vm835, %v1887, %v1888
      %v1890 = vrot.slane %v1854, 1
      %v1891 = vrot.slane %v1582, 1
      %v1892 = vsel %vm835, %v1890, %v1891
      %v1893 = vrot.slane %v1855, 1
      %v1894 = vrot.slane %v1583, 1
      %v1895 = vsel %vm835, %v1893, %v1894
      %v1896 = vrot.slane %v1856, 1
      %v1897 = vrot.slane %v1584, 1
      %v1898 = vsel %vm835, %v1896, %v1897
      %v1899 = vrot.slane %v1857, 1
      %v1900 = vrot.slane %v1585, 1
      %v1901 = vsel %vm835, %v1899, %v1900
      %v1902 = vrot.slane %v1858, 1
      %v1903 = vrot.slane %v1586, 1
      %v1904 = vsel %vm835, %v1902, %v1903
      %v1905 = vrot.slane %v1859, 1
      %v1906 = vrot.slane %v1587, 1
      %v1907 = vsel %vm835, %v1905, %v1906
      %1908 = vrot.lane.b32.xlu0 %v1862, 64
      %v1909 = vpop.permute.xlu0 %1908
      %1910 = vrot.lane.b32.xlu0 %v1865, 64
      %v1911 = vpop.permute.xlu0 %1910
      %1912 = vrot.lane.b32.xlu0 %v1868, 64
      %v1913 = vpop.permute.xlu0 %1912
      %1914 = vrot.lane.b32.xlu0 %v1871, 64
      %v1915 = vpop.permute.xlu0 %1914
      %1916 = vrot.lane.b32.xlu0 %v1874, 64
      %v1917 = vpop.permute.xlu0 %1916
      %1918 = vrot.lane.b32.xlu0 %v1877, 64
      %v1919 = vpop.permute.xlu0 %1918
      %1920 = vrot.lane.b32.xlu0 %v1880, 64
      %v1921 = vpop.permute.xlu0 %1920
      %1922 = vrot.lane.b32.xlu0 %v1883, 64
      %v1923 = vpop.permute.xlu0 %1922
      %1924 = vrot.lane.b32.xlu0 %v1886, 64
      %v1925 = vpop.permute.xlu0 %1924
      %1926 = vrot.lane.b32.xlu0 %v1889, 64
      %v1927 = vpop.permute.xlu0 %1926
      %1928 = vrot.lane.b32.xlu0 %v1892, 64
      %v1929 = vpop.permute.xlu0 %1928
      %1930 = vrot.lane.b32.xlu0 %v1895, 64
      %v1931 = vpop.permute.xlu0 %1930
      %1932 = vrot.lane.b32.xlu0 %v1898, 64
      %v1933 = vpop.permute.xlu0 %1932
      %1934 = vrot.lane.b32.xlu0 %v1901, 64
      %v1935 = vpop.permute.xlu0 %1934
      %1936 = vrot.lane.b32.xlu0 %v1904, 64
      %v1937 = vpop.permute.xlu0 %1936
      %1938 = vrot.lane.b32.xlu0 %v1907, 64
      %v1939 = vpop.permute.xlu0 %1938
      %vm1940 = vcmask 64512
      %v1942 = vsel %vm1940, %v498, %v756
      %v1944 = vsel %vm1940, %v499, %v758
      %v1946 = vsel %vm1940, %v500, %v760
      %v1948 = vsel %vm1940, %v501, %v762
      %v1950 = vsel %vm1940, %v502, %v764
      %v1952 = vsel %vm1940, %v503, %v766
      %v1954 = vsel %vm1940, %v504, %v768
      %v1956 = vsel %vm1940, %v505, %v770
      %v1958 = vsel %vm1940, %v506, %v772
      %v1960 = vsel %vm1940, %v507, %v774
      %v1962 = vsel %vm1940, %v508, %v776
      %v1964 = vsel %vm1940, %v509, %v778
      %v1966 = vsel %vm1940, %v510, %v780
      %v1968 = vsel %vm1940, %v511, %v782
      %v1970 = vsel %vm1940, %v512, %v784
      %v1972 = vsel %vm1940, %v513, %v786
      %vm1973 = vcmask 130048
      %v1975 = vsel %vm1973, %v1942, %v885
      %v1977 = vsel %vm1973, %v1944, %v887
      %v1979 = vsel %vm1973, %v1946, %v889
      %v1981 = vsel %vm1973, %v1948, %v891
      %v1983 = vsel %vm1973, %v1950, %v893
      %v1985 = vsel %vm1973, %v1952, %v895
      %v1987 = vsel %vm1973, %v1954, %v897
      %v1989 = vsel %vm1973, %v1956, %v899
      %v1991 = vsel %vm1973, %v1958, %v901
      %v1993 = vsel %vm1973, %v1960, %v903
      %v1995 = vsel %vm1973, %v1962, %v905
      %v1997 = vsel %vm1973, %v1964, %v907
      %v1999 = vsel %vm1973, %v1966, %v909
      %v2001 = vsel %vm1973, %v1968, %v911
      %v2003 = vsel %vm1973, %v1970, %v913
      %v2005 = vsel %vm1973, %v1972, %v915
      %vm2006 = vcmask 195584
      %v2008 = vsel %vm2006, %v1975, %v997
      %v2010 = vsel %vm2006, %v1977, %v999
      %v2012 = vsel %vm2006, %v1979, %v1001
      %v2014 = vsel %vm2006, %v1981, %v1003
      %v2016 = vsel %vm2006, %v1983, %v1005
      %v2018 = vsel %vm2006, %v1985, %v1007
      %v2020 = vsel %vm2006, %v1987, %v1009
      %v2022 = vsel %vm2006, %v1989, %v1011
      %v2024 = vsel %vm2006, %v1991, %v1013
      %v2026 = vsel %vm2006, %v1993, %v1015
      %v2028 = vsel %vm2006, %v1995, %v1017
      %v2030 = vsel %vm2006, %v1997, %v1019
      %v2032 = vsel %vm2006, %v1999, %v1021
      %v2034 = vsel %vm2006, %v2001, %v1023
      %v2036 = vsel %vm2006, %v2003, %v1025
      %v2038 = vsel %vm2006, %v2005, %v1027
      %vm2039 = vcmask 261120
      %v2041 = vsel %vm2039, %v2008, %v1269
      %v2043 = vsel %vm2039, %v2010, %v1271
      %v2045 = vsel %vm2039, %v2012, %v1273
      %v2047 = vsel %vm2039, %v2014, %v1275
      %v2049 = vsel %vm2039, %v2016, %v1277
      %v2051 = vsel %vm2039, %v2018, %v1279
      %v2053 = vsel %vm2039, %v2020, %v1281
      %v2055 = vsel %vm2039, %v2022, %v1283
      %v2057 = vsel %vm2039, %v2024, %v1285
      %v2059 = vsel %vm2039, %v2026, %v1287
      %v2061 = vsel %vm2039, %v2028, %v1289
      %v2063 = vsel %vm2039, %v2030, %v1291
      %v2065 = vsel %vm2039, %v2032, %v1293
      %v2067 = vsel %vm2039, %v2034, %v1295
      %v2069 = vsel %vm2039, %v2036, %v1297
      %v2071 = vsel %vm2039, %v2038, %v1299
      %vm2072 = vcmask 326656
      %v2074 = vsel %vm2072, %v2041, %v1397
      %v2076 = vsel %vm2072, %v2043, %v1399
      %v2078 = vsel %vm2072, %v2045, %v1401
      %v2080 = vsel %vm2072, %v2047, %v1403
      %v2082 = vsel %vm2072, %v2049, %v1405
      %v2084 = vsel %vm2072, %v2051, %v1407
      %v2086 = vsel %vm2072, %v2053, %v1409
      %v2088 = vsel %vm2072, %v2055, %v1411
      %v2090 = vsel %vm2072, %v2057, %v1413
      %v2092 = vsel %vm2072, %v2059, %v1415
      %v2094 = vsel %vm2072, %v2061, %v1417
      %v2096 = vsel %vm2072, %v2063, %v1419
      %v2098 = vsel %vm2072, %v2065, %v1421
      %v2100 = vsel %vm2072, %v2067, %v1423
      %v2102 = vsel %vm2072, %v2069, %v1425
      %v2104 = vsel %vm2072, %v2071, %v1427
      %vm2105 = vcmask 392192
      %v2107 = vsel %vm2105, %v2074, %v1509
      %v2109 = vsel %vm2105, %v2076, %v1511
      %v2111 = vsel %vm2105, %v2078, %v1513
      %v2113 = vsel %vm2105, %v2080, %v1515
      %v2115 = vsel %vm2105, %v2082, %v1517
      %v2117 = vsel %vm2105, %v2084, %v1519
      %v2119 = vsel %vm2105, %v2086, %v1521
      %v2121 = vsel %vm2105, %v2088, %v1523
      %v2123 = vsel %vm2105, %v2090, %v1525
      %v2125 = vsel %vm2105, %v2092, %v1527
      %v2127 = vsel %vm2105, %v2094, %v1529
      %v2129 = vsel %vm2105, %v2096, %v1531
      %v2131 = vsel %vm2105, %v2098, %v1533
      %v2133 = vsel %vm2105, %v2100, %v1535
      %v2135 = vsel %vm2105, %v2102, %v1537
      %v2137 = vsel %vm2105, %v2104, %v1539
      %vm2138 = vcmask 457728
      %v2140 = vsel %vm2138, %v2107, %v1781
      %v2142 = vsel %vm2138, %v2109, %v1783
      %v2144 = vsel %vm2138, %v2111, %v1785
      %v2146 = vsel %vm2138, %v2113, %v1787
      %v2148 = vsel %vm2138, %v2115, %v1789
      %v2150 = vsel %vm2138, %v2117, %v1791
      %v2152 = vsel %vm2138, %v2119, %v1793
      %v2154 = vsel %vm2138, %v2121, %v1795
      %v2156 = vsel %vm2138, %v2123, %v1797
      %v2158 = vsel %vm2138, %v2125, %v1799
      %v2160 = vsel %vm2138, %v2127, %v1801
      %v2162 = vsel %vm2138, %v2129, %v1803
      %v2164 = vsel %vm2138, %v2131, %v1805
      %v2166 = vsel %vm2138, %v2133, %v1807
      %v2168 = vsel %vm2138, %v2135, %v1809
      %v2170 = vsel %vm2138, %v2137, %v1811
      %vm2171 = vcmask 523264
      %v2173 = vsel %vm2171, %v2140, %v1909
      %v2175 = vsel %vm2171, %v2142, %v1911
      %v2177 = vsel %vm2171, %v2144, %v1913
      %v2179 = vsel %vm2171, %v2146, %v1915
      %v2181 = vsel %vm2171, %v2148, %v1917
      %v2183 = vsel %vm2171, %v2150, %v1919
      %v2185 = vsel %vm2171, %v2152, %v1921
      %v2187 = vsel %vm2171, %v2154, %v1923
      %v2189 = vsel %vm2171, %v2156, %v1925
      %v2191 = vsel %vm2171, %v2158, %v1927
      %v2193 = vsel %vm2171, %v2160, %v1929
      %v2195 = vsel %vm2171, %v2162, %v1931
      %v2197 = vsel %vm2171, %v2164, %v1933
      %v2199 = vsel %vm2171, %v2166, %v1935
      %v2201 = vsel %vm2171, %v2168, %v1937
      %v2203 = vsel %vm2171, %v2170, %v1939
      %v2204 = vld [vmem:[%s223] sm:$0xf]
      %v2205 = vld [vmem:[%s223 + $0x4] sm:$0xf]
      %v2206 = vld [vmem:[%s223 + $0x8] sm:$0xf]
      %v2207 = vld [vmem:[%s223 + $0xc] sm:$0xf]
      %v2208 = vld [vmem:[%s223 + $0x10] sm:$0xf]
      %v2209 = vld [vmem:[%s223 + $0x14] sm:$0xf]
      %v2210 = vld [vmem:[%s223 + $0x18] sm:$0xf]
      %v2211 = vld [vmem:[%s223 + $0x1c] sm:$0xf]
      %v2212 = vld [vmem:[%s223 + $0x20] sm:$0xf]
      %v2213 = vld [vmem:[%s226] sm:$0x1]
      %v2215 = vlaneseq
      %v2216 = vshrl.u32 %v2215, 7
      %v2217 = vsub.s32 0, %v2216
      %v2218 = vrot.slane %v2213, %v2217
      %v2229 = vunpack.c.l.b16 %v2204
      %v2230 = vunpack.c.l.b16 %v2205
      %v2231 = vunpack.c.l.b16 %v2206
      %v2232 = vunpack.c.l.b16 %v2207
      %v2233 = vunpack.c.l.b16 %v2208
      %v2234 = vunpack.c.l.b16 %v2209
      %v2235 = vunpack.c.l.b16 %v2210
      %v2236 = vunpack.c.l.b16 %v2211
      %v2237 = vunpack.c.l.b16 %v2212
      %v2238 = vpack.c.b16 %v2230, %v2229
      %v2239 = vpack.c.b16 %v2232, %v2231
      %v2240 = vpack.c.b16 %v2234, %v2233
      %v2241 = vpack.c.b16 %v2236, %v2235
      %v2242 = vpack.c.b16 %v2237, %v2237
      %vm2247 = vcmask 588800
      %v2248 = vsel %vm2247, %v2173, 0
      %v2250 = vsel %vm2247, %v2175, 0
      %v2252 = vsel %vm2247, %v2177, 0
      %v2254 = vsel %vm2247, %v2179, 0
      %v2256 = vsel %vm2247, %v2181, 0
      %v2258 = vsel %vm2247, %v2183, 0
      %v2260 = vsel %vm2247, %v2185, 0
      %v2262 = vsel %vm2247, %v2187, 0
      %v2264 = vsel %vm2247, %v2189, 0
      %v2266 = vsel %vm2247, %v2191, 0
      %v2268 = vsel %vm2247, %v2193, 0
      %v2270 = vsel %vm2247, %v2195, 0
      %v2272 = vsel %vm2247, %v2197, 0
      %v2274 = vsel %vm2247, %v2199, 0
      %v2276 = vsel %vm2247, %v2201, 0
      %v2278 = vsel %vm2247, %v2203, 0
      %vm2280 = vcmask 1043456
      %v2282 = vsel %vm2280, %v2242, 0
      %2284 = vmatprep.subr.bf16.mxu0 0
      %2285 = vmatpush1.bf16.msra.mxu0 %v2238
      %2286 = vmatprep.subr.bf16.mxu0 0
      %2287 = vmatpush1.bf16.msra.mxu0 %v2239
      %2288 = vmatprep.subr.bf16.mxu0 0
      %2289 = vmatpush1.bf16.msra.mxu0 %v2240
      %2290 = vmatprep.subr.bf16.mxu0 0
      %2291 = vmatpush1.bf16.msra.mxu0 %v2241
      %2292 = vmatprep.subr.bf16.mxu0 0
      %2293 = vmatpush1.bf16.msra.mxu0 %v2282
      %2294 = vmatprep.subr.bf16.mxu0 0
      %2295 = vmatpush1.bf16.msra.mxu0 0
      %2296 = vmatprep.subr.bf16.mxu0 0
      %2297 = vmatpush1.bf16.msra.mxu0 0
      %2298 = vmatprep.subr.bf16.mxu0 0
      %2299 = vmatpush1.bf16.msra.mxu0 0
      %2300 = vmatprep.subr.bf16.mxu0 0
      %2301 = vmatpush1.bf16.msra.mxu0 0
      %2302 = vmatprep.subr.bf16.mxu0 0
      %2303 = vmatpush1.bf16.msra.mxu0 0
      %2304 = vmatprep.subr.bf16.mxu0 0
      %2305 = vmatpush1.bf16.msra.mxu0 0
      %2306 = vmatprep.subr.bf16.mxu0 0
      %2307 = vmatpush1.bf16.msra.mxu0 0
      %2308 = vmatprep.subr.bf16.mxu0 0
      %2309 = vmatpush1.bf16.msra.mxu0 0
      %2310 = vmatprep.subr.bf16.mxu0 0
      %2311 = vmatpush1.bf16.msra.mxu0 0
      %2312 = vmatprep.subr.bf16.mxu0 0
      %2313 = vmatpush1.bf16.msra.mxu0 0
      %2314 = vmatprep.subr.bf16.mxu0 0
      %2315 = vmatpush1.bf16.msra.mxu0 0
      %2316 = vmatprep.mubr.bf16.mxu0 0
      %2317 = vmatmul.mubr.bf16.gmra.mrb[0].mxu0 %v2248
      %v2318 = vpop.f32.mrb[0].mxu0
      %v2319 = vadd.f32 %v2218, %v2318
      %v2320 = vpop.f32.mrb[0].mxu0
      %v2321 = vpop.f32.mrb[0].mxu0
      %v2322 = vadd.f32 %v2218, %v2321
      %v2323 = vpop.f32.mrb[0].mxu0
      %2324 = vmatprep.mubr.bf16.mxu0 0
      %2325 = vmatmul.mubr.bf16.gmra.mrb[0].mxu0 %v2250
      %v2326 = vpop.f32.mrb[0].mxu0
      %v2327 = vadd.f32 %v2218, %v2326
      %v2328 = vpop.f32.mrb[0].mxu0
      %v2329 = vpop.f32.mrb[0].mxu0
      %v2330 = vadd.f32 %v2218, %v2329
      %v2331 = vpop.f32.mrb[0].mxu0
      %2332 = vmatprep.mubr.bf16.mxu0 0
      %2333 = vmatmul.mubr.bf16.gmra.mrb[0].mxu0 %v2252
      %v2334 = vpop.f32.mrb[0].mxu0
      %v2335 = vadd.f32 %v2218, %v2334
      %v2336 = vpop.f32.mrb[0].mxu0
      %v2337 = vpop.f32.mrb[0].mxu0
      %v2338 = vadd.f32 %v2218, %v2337
      %v2339 = vpop.f32.mrb[0].mxu0
      %2340 = vmatprep.mubr.bf16.mxu0 0
      %2341 = vmatmul.mubr.bf16.gmra.mrb[0].mxu0 %v2254
      %v2342 = vpop.f32.mrb[0].mxu0
      %v2343 = vadd.f32 %v2218, %v2342
      %v2344 = vpop.f32.mrb[0].mxu0
      %v2345 = vpop.f32.mrb[0].mxu0
      %v2346 = vadd.f32 %v2218, %v2345
      %v2347 = vpop.f32.mrb[0].mxu0
      %2348 = vmatprep.mubr.bf16.mxu0 0
      %2349 = vmatmul.mubr.bf16.gmra.mrb[0].mxu0 %v2256
      %v2350 = vpop.f32.mrb[0].mxu0
      %v2351 = vadd.f32 %v2218, %v2350
      %v2352 = vpop.f32.mrb[0].mxu0
      %v2353 = vpop.f32.mrb[0].mxu0
      %v2354 = vadd.f32 %v2218, %v2353
      %v2355 = vpop.f32.mrb[0].mxu0
      %2356 = vmatprep.mubr.bf16.mxu0 0
      %2357 = vmatmul.mubr.bf16.gmra.mrb[0].mxu0 %v2258
      %v2358 = vpop.f32.mrb[0].mxu0
      %v2359 = vadd.f32 %v2218, %v2358
      %v2360 = vpop.f32.mrb[0].mxu0
      %v2361 = vpop.f32.mrb[0].mxu0
      %v2362 = vadd.f32 %v2218, %v2361
      %v2363 = vpop.f32.mrb[0].mxu0
      %2364 = vmatprep.mubr.bf16.mxu0 0
      %2365 = vmatmul.mubr.bf16.gmra.mrb[0].mxu0 %v2260
      %v2366 = vpop.f32.mrb[0].mxu0
      %v2367 = vadd.f32 %v2218, %v2366
      %v2368 = vpop.f32.mrb[0].mxu0
      %v2369 = vpop.f32.mrb[0].mxu0
      %v2370 = vadd.f32 %v2218, %v2369
      %v2371 = vpop.f32.mrb[0].mxu0
      %2372 = vmatprep.mubr.bf16.mxu0 0
      %2373 = vmatmul.mubr.bf16.gmra.mrb[0].mxu0 %v2262
      %v2374 = vpop.f32.mrb[0].mxu0
      %v2375 = vadd.f32 %v2218, %v2374
      %v2376 = vpop.f32.mrb[0].mxu0
      %v2377 = vpop.f32.mrb[0].mxu0
      %v2378 = vadd.f32 %v2218, %v2377
      %v2379 = vpop.f32.mrb[0].mxu0
      %2380 = vmatprep.mubr.bf16.mxu0 0
      %2381 = vmatmul.mubr.bf16.gmra.mrb[0].mxu0 %v2264
      %v2382 = vpop.f32.mrb[0].mxu0
      %v2383 = vadd.f32 %v2218, %v2382
      %v2384 = vpop.f32.mrb[0].mxu0
      %v2385 = vpop.f32.mrb[0].mxu0
      %v2386 = vadd.f32 %v2218, %v2385
      %v2387 = vpop.f32.mrb[0].mxu0
      %2388 = vmatprep.mubr.bf16.mxu0 0
      %2389 = vmatmul.mubr.bf16.gmra.mrb[0].mxu0 %v2266
      %v2390 = vpop.f32.mrb[0].mxu0
      %v2391 = vadd.f32 %v2218, %v2390
      %v2392 = vpop.f32.mrb[0].mxu0
      %v2393 = vpop.f32.mrb[0].mxu0
      %v2394 = vadd.f32 %v2218, %v2393
      %v2395 = vpop.f32.mrb[0].mxu0
      %2396 = vmatprep.mubr.bf16.mxu0 0
      %2397 = vmatmul.mubr.bf16.gmra.mrb[0].mxu0 %v2268
      %v2398 = vpop.f32.mrb[0].mxu0
      %v2399 = vadd.f32 %v2218, %v2398
      %v2400 = vpop.f32.mrb[0].mxu0
      %v2401 = vpop.f32.mrb[0].mxu0
      %v2402 = vadd.f32 %v2218, %v2401
      %v2403 = vpop.f32.mrb[0].mxu0
      %2404 = vmatprep.mubr.bf16.mxu0 0
      %2405 = vmatmul.mubr.bf16.gmra.mrb[0].mxu0 %v2270
      %v2406 = vpop.f32.mrb[0].mxu0
      %v2407 = vadd.f32 %v2218, %v2406
      %v2408 = vpop.f32.mrb[0].mxu0
      %v2409 = vpop.f32.mrb[0].mxu0
      %v2410 = vadd.f32 %v2218, %v2409
      %v2411 = vpop.f32.mrb[0].mxu0
      %2412 = vmatprep.mubr.bf16.mxu0 0
      %2413 = vmatmul.mubr.bf16.gmra.mrb[0].mxu0 %v2272
      %v2414 = vpop.f32.mrb[0].mxu0
      %v2415 = vadd.f32 %v2218, %v2414
      %v2416 = vpop.f32.mrb[0].mxu0
      %v2417 = vpop.f32.mrb[0].mxu0
      %v2418 = vadd.f32 %v2218, %v2417
      %v2419 = vpop.f32.mrb[0].mxu0
      %2420 = vmatprep.mubr.bf16.mxu0 0
      %2421 = vmatmul.mubr.bf16.gmra.mrb[0].mxu0 %v2274
      %v2422 = vpop.f32.mrb[0].mxu0
      %v2423 = vadd.f32 %v2218, %v2422
      %v2424 = vpop.f32.mrb[0].mxu0
      %v2425 = vpop.f32.mrb[0].mxu0
      %v2426 = vadd.f32 %v2218, %v2425
      %v2427 = vpop.f32.mrb[0].mxu0
      %2428 = vmatprep.mubr.bf16.mxu0 0
      %2429 = vmatmul.mubr.bf16.gmra.mrb[0].mxu0 %v2276
      %v2430 = vpop.f32.mrb[0].mxu0
      %v2431 = vadd.f32 %v2218, %v2430
      %v2432 = vpop.f32.mrb[0].mxu0
      %v2433 = vpop.f32.mrb[0].mxu0
      %v2434 = vadd.f32 %v2218, %v2433
      %v2435 = vpop.f32.mrb[0].mxu0
      %2436 = vmatprep.mubr.bf16.mxu0 0
      %2437 = vmatmul.mubr.bf16.gmra.mrb[0].mxu0 %v2278
      %v2438 = vpop.f32.mrb[0].mxu0
      %v2439 = vadd.f32 %v2218, %v2438
      %v2440 = vpop.f32.mrb[0].mxu0
      %v2441 = vpop.f32.mrb[0].mxu0
      %v2442 = vadd.f32 %v2218, %v2441
      %v2443 = vpop.f32.mrb[0].mxu0
      %2444 = vdwg.mxu0
      %2445 = vst [vmem:[%s238] sm:$0xff] %v2319
      %2446 = vst [vmem:[%s238 + $0x8] sm:$0xff] %v2322
      %2447 = vst [vmem:[%s238 + $0x10] sm:$0xff] %v2327
      %2448 = vst [vmem:[%s238 + $0x18] sm:$0xff] %v2330
      %2449 = vst [vmem:[%s238 + $0x20] sm:$0xff] %v2335
      %2450 = vst [vmem:[%s238 + $0x28] sm:$0xff] %v2338
      %2451 = vst [vmem:[%s238 + $0x30] sm:$0xff] %v2343
      %2452 = vst [vmem:[%s238 + $0x38] sm:$0xff] %v2346
      %2453 = vst [vmem:[%s238 + $0x40] sm:$0xff] %v2351
      %2454 = vst [vmem:[%s238 + $0x48] sm:$0xff] %v2354
      %2455 = vst [vmem:[%s238 + $0x50] sm:$0xff] %v2359
      %2456 = vst [vmem:[%s238 + $0x58] sm:$0xff] %v2362
      %2457 = vst [vmem:[%s238 + $0x60] sm:$0xff] %v2367
      %2458 = vst [vmem:[%s238 + $0x68] sm:$0xff] %v2370
      %2459 = vst [vmem:[%s238 + $0x70] sm:$0xff] %v2375
      %2460 = vst [vmem:[%s238 + $0x78] sm:$0xff] %v2378
      %2461 = vst [vmem:[%s238 + $0x80] sm:$0xff] %v2383
      %2462 = vst [vmem:[%s238 + $0x88] sm:$0xff] %v2386
      %2463 = vst [vmem:[%s238 + $0x90] sm:$0xff] %v2391
      %2464 = vst [vmem:[%s238 + $0x98] sm:$0xff] %v2394
      %2465 = vst [vmem:[%s238 + $0xa0] sm:$0xff] %v2399
      %2466 = vst [vmem:[%s238 + $0xa8] sm:$0xff] %v2402
      %2467 = vst [vmem:[%s238 + $0xb0] sm:$0xff] %v2407
      %2468 = vst [vmem:[%s238 + $0xb8] sm:$0xff] %v2410
      %2469 = vst [vmem:[%s238 + $0xc0] sm:$0xff] %v2415
      %2470 = vst [vmem:[%s238 + $0xc8] sm:$0xff] %v2418
      %2471 = vst [vmem:[%s238 + $0xd0] sm:$0xff] %v2423
      %2472 = vst [vmem:[%s238 + $0xd8] sm:$0xff] %v2426
      %2473 = vst [vmem:[%s238 + $0xe0] sm:$0xff] %v2431
      %2474 = vst [vmem:[%s238 + $0xe8] sm:$0xff] %v2434
      %2475 = vst [vmem:[%s238 + $0xf0] sm:$0xff] %v2439
      %2476 = vst [vmem:[%s238 + $0xf8] sm:$0xff] %v2442
      %p2477 = scmp.lt.s32.totalorder %s19, 1
      %s2478 = scalar_select %p2477, %s19, 1
      %p2479 = scmp.lt.s32.totalorder %s21, 0
      %s2480 = scalar_select %p2479, %s21, 0
      %p2481 = scmp.lt.s32.totalorder %s20, 0
      %s2482 = scalar_select %p2481, %s20, 0
      %s2483 = smul.addr %s2480, 32
      %s2484 = sadd.s32 %s2482, %s2483
      %s2485 = smul.addr %s2478, 32
      %s2486 = sadd.s32 %s2484, %s2485
      %s2487 = smul.addr %s2486, 8
      %s2488 = scalar_lea.vmem %s3, %s2487
      // Predicated region
      $region33: #{eaconv2d_forward.1} parent=31 // pred_check
        %p2489 = pneg %p133
      $region34: #{eaconv2d_forward.1} parent=31 // pred_check_branch
        %2491 = sbr.rel (%p2489) target = $region36
      $region35: #{eaconv2d_forward.1} parent=31 // pred_region
        _
      $region36: #{eaconv2d_forward.1} parent=31 // pred_fallthru
        _
    $region32: #{eaconv2d_forward.1} parent=5 // pred_fallthru
      _
    %p2492 = scmp.le.s32.totalorder 2, %s9
    // Predicated region
    $region37: #{eaconv2d_forward.1} parent=5 // pred_check
      %p2493 = pneg %p2492
    $region38: #{eaconv2d_forward.1} parent=5 // pred_check_branch
      %2495 = sbr.rel (%p2493) target = $region40
    $region39: #{eaconv2d_forward.1} parent=5 // pred_region
      %s2496 = ssub.s32 %s9, 2
      // Predicated region
      $region41: #{eaconv2d_forward.1} parent=39 // pred_check
        %p2497 = pneg %p139
      $region42: #{eaconv2d_forward.1} parent=39 // pred_check_branch
        %2499 = sbr.rel (%p2497) target = $region44
      $region43: #{eaconv2d_forward.1} parent=39 // pred_region
        %p2500 = scmp.lt.s32.totalorder %s22, 1
        %s2501 = scalar_select %p2500, %s22, 1
        %p2502 = scmp.lt.s32.totalorder %s24, 0
        %s2503 = scalar_select %p2502, %s24, 0
        %p2504 = scmp.lt.s32.totalorder %s23, 0
        %s2505 = scalar_select %p2504, %s23, 0
        %s2506 = smul.addr %s2503, 32
        %s2507 = sadd.s32 %s2505, %s2506
        %s2508 = smul.addr %s2501, 32
        %s2509 = sadd.s32 %s2507, %s2508
        %s2510 = smul.addr %s2509, 8
        %s2511 = scalar_lea.vmem %s3, %s2510
      $region44: #{eaconv2d_forward.1} parent=39 // pred_fallthru
        _
    $region40: #{eaconv2d_forward.1} parent=5 // pred_fallthru
      _
  $region6: #{eaconv2d_forward.1} parent=0 // loop_footer
    %s13 = sadd.s32 1, %s9
  $region7: #{eaconv2d_forward.1} parent=0 // loop_footer_branch
    %8 = sbr.rel target = $region3
  $region8: #{eaconv2d_forward.1} parent=0 // loop_exit
    _

</llo_original>
